<compile_context>
chip_gen: v7x
topology: tpu7x:2x2x1
jax: 0.10.0
libtpu: 0.0.40
codegen_flags: <defaults>
</compile_context>

<pallas_src>
import numpy as np
import jax
import jax.numpy as jnp
from jax import lax
from jax.experimental import pallas as pl
from jax.experimental.pallas import tpu as pltpu

NEG_SLOPE = 0.01  # torch.nn.LeakyReLU default negative_slope


def _leaky(x):
    return jnp.where(x > 0, x, NEG_SLOPE * x)


# For k=4 / stride=2 / pad=1:  (k_idx - 1) = 2*a + b  with b in {0, 1}.
_PAR_A = (-1, 0, 0, 1)
_PAR_B = (1, 0, 1, 0)


def _shifted_plane(plane, a_i, a_j, hq, wq):
    """Zero-filled spatial shift of a flattened (wq*hq, C) plane.

    Plane rows are ordered flat = j*hq + i (j outer / i inner).  Returns `view`
    with view[j*hq + i, :] = plane[(j+a_j)*hq + (i+a_i), :] when the shifted
    index is in range, else 0.  One XLU sublane roll + a static iota row mask:
    no strided slices, no zero-padded scratch, no gather matmul.
    """
    if a_i == 0 and a_j == 0:
        return plane
    rows = hq * wq
    s = hq * a_j + a_i
    rolled = pltpu.roll(plane, shift=(-s) % rows, axis=0)
    r = lax.broadcasted_iota(jnp.int32, (rows, 1), 0)
    i_idx = r & (hq - 1)                  # hq is a power of two
    j_idx = r >> int(np.log2(hq))
    ok = ((i_idx + a_i >= 0) & (i_idx + a_i < hq) &
          (j_idx + a_j >= 0) & (j_idx + a_j < wq))
    return jnp.where(ok, rolled, jnp.zeros_like(rolled))


def _make_kernel(hq, wq):
    rows = hq * wq  # conv2/conv3 output positions per image

    def kernel(cols1_ref, w1_ref, w2_ref, w3_ref, out_ref):
        # ---- conv1 (k=4,s=2,p=1): one bf16 MXU matmul on wrapper-im2col'd rows
        h1 = _leaky(jnp.dot(cols1_ref[0], w1_ref[...],
                            preferred_element_type=jnp.float32))    # (4*rows, 32) f32
        # h1 rows: parity plane p = py*2+px major, then flat = j*hq + i.

        # ---- conv2 (k=4,s=2,p=1): shift-and-matmul, one big-K bf16 matmul ---
        views = []
        for ky in range(4):
            a_i, b_i = _PAR_A[ky], _PAR_B[ky]
            for kx in range(4):                                      # tap t = ky*4+kx
                a_j, b_j = _PAR_A[kx], _PAR_B[kx]
                p = b_i * 2 + b_j
                plane = h1[p * rows:(p + 1) * rows, :]               # (rows, 32), aligned
                views.append(_shifted_plane(plane, a_i, a_j, hq, wq))
        big2 = jnp.concatenate(views, axis=1).astype(jnp.bfloat16)   # (rows, 16*32)
        h2 = _leaky(jnp.dot(big2, w2_ref[...],
                            preferred_element_type=jnp.float32))     # (rows, 64) f32

        # ---- conv3 (k=3,s=1,p=1): shift-and-matmul, one big-K bf16 matmul ---
        views = []
        for ky in range(3):
            for kx in range(3):                                      # tap t = ky*3+kx
                views.append(_shifted_plane(h2, ky - 1, kx - 1, hq, wq))
        big3 = jnp.concatenate(views, axis=1).astype(jnp.bfloat16)   # (rows, 9*64)
        h3 = _leaky(jnp.dot(big3, w3_ref[...],
                            preferred_element_type=jnp.float32))     # (rows, 64) f32

        # ---- lane-dense store: out[i, j*C + c] = h3[j*hq + i, c]  -> (hq, wq*C)
        blocks = []
        for j in range(wq):
            blk = h3 if j == 0 else pltpu.roll(h3, shift=(rows - hq * j) % rows, axis=0)
            blocks.append(blk[:hq, :])
        out_ref[0] = jnp.concatenate(blocks, axis=1).astype(out_ref.dtype)

    return kernel


# -----------------------------------------------------------------------------
# Wrapper-side layout plumbing (done once, outside the kernel)
# -----------------------------------------------------------------------------
def _build_cols1(x_nhwc, hq, wq):
    """im2col for conv1 (k=4,s=2,p=1) with rows in parity-plane-major order.

    Per image, row R = ((py*2+px)*wq + j)*hq + i  <->  conv1 output pixel
    (y1, x1) = (2*i + py, 2*j + px).  Column order is (ky, kx, cin), matching
    w1_hwio.reshape(16*cin, 32).
    """
    n, h, w, cin = x_nhwc.shape
    xp = jnp.pad(x_nhwc, ((0, 0), (1, 1), (1, 1), (0, 0)))
    ys, xs = [], []
    for py in range(2):
        for px in range(2):
            for j in range(wq):
                for i in range(hq):
                    ys.append(2 * i + py)
                    xs.append(2 * j + px)
    ys = np.asarray(ys, np.int32)
    xs = np.asarray(xs, np.int32)
    ky = np.repeat(np.arange(4, dtype=np.int32), 4)   # tap t = ky*4 + kx
    kx = np.tile(np.arange(4, dtype=np.int32), 4)
    Y = 2 * ys[:, None] + ky[None, :]                 # padded-input row index
    X = 2 * xs[:, None] + kx[None, :]
    cols = xp[:, Y, X, :]                             # (N, R, 16, Cin)
    return cols.reshape(n, 4 * hq * wq, 16 * cin)


def representation_forward(x_nhwc, w1_hwio, w2_hwio, w3_hwio):
    """RepresentationNetwork forward.  x_nhwc: (N, H, W, Cin) f32, HWIO weights."""
    n, h, w, cin = x_nhwc.shape
    c1, c2, c3 = w1_hwio.shape[-1], w2_hwio.shape[-1], w3_hwio.shape[-1]
    assert h % 4 == 0 and w % 4 == 0, "spatial dims must be divisible by 4"
    hq, wq = h // 4, w // 4                   # conv2 == conv3 output spatial size
    assert hq & (hq - 1) == 0, "hq must be a power of two (in-kernel bit-mask math)"
    rows = hq * wq

    # bf16 MXU operands (f32 accumulation happens inside the kernel).
    cols1 = _build_cols1(x_nhwc, hq, wq).astype(jnp.bfloat16)       # (N, 4*rows, 16*cin)
    w1_2d = w1_hwio.reshape(4 * 4 * cin, c1).astype(jnp.bfloat16)
    w2_2d = w2_hwio.reshape(4 * 4 * c1, c2).astype(jnp.bfloat16)
    w3_2d = w3_hwio.reshape(3 * 3 * c2, c3).astype(jnp.bfloat16)

    out = pl.pallas_call(
        _make_kernel(hq, wq),
        out_shape=jax.ShapeDtypeStruct((n, hq, wq * c3), jnp.float32),
        grid_spec=pltpu.PrefetchScalarGridSpec(
            num_scalar_prefetch=0,
            grid=(n,),                                   # batch-parallel grid axis
            in_specs=[
                pl.BlockSpec((1, 4 * rows, 16 * cin), lambda b: (b, 0, 0)),
                pl.BlockSpec((4 * 4 * cin, c1), lambda b: (0, 0)),
                pl.BlockSpec((4 * 4 * c1, c2), lambda b: (0, 0)),
                pl.BlockSpec((3 * 3 * c2, c3), lambda b: (0, 0)),
            ],
            out_specs=pl.BlockSpec((1, hq, wq * c3), lambda b: (b, 0, 0)),
        ),
        compiler_params=pltpu.CompilerParams(
            dimension_semantics=("parallel",)),          # lets v7x shard over both TCs
    )(cols1, w1_2d, w2_2d, w3_2d)

    return out.reshape(n, hq, wq, c3)                    # NHWC


# -----------------------------------------------------------------------------
# Reference + test
# -----------------------------------------------------------------------------
def _reference(x_nhwc, w1, w2, w3, matmul_dtype=jnp.float32):
    def conv(x, wgt, stride, pad):
        dn = lax.conv_dimension_numbers(x.shape, wgt.shape, ("NHWC", "HWIO", "NHWC"))
        return lax.conv_general_dilated(
            x.astype(matmul_dtype), wgt.astype(matmul_dtype),
            window_strides=(stride, stride), padding=((pad, pad), (pad, pad)),
            dimension_numbers=dn, preferred_element_type=jnp.float32,
            precision=lax.Precision.HIGHEST)
    out = _leaky(conv(x_nhwc, w1, 2, 1))
    out = _leaky(conv(out, w2, 2, 1))
    out = _leaky(conv(out, w3, 1, 1))
    return out


if __name__ == "__main__":
    key = jax.random.PRNGKey(0)
    k_x, k_w1, k_w2, k_w3 = jax.random.split(key, 4)

    # PyTorch spec: observation_shape=(4, 16, 16), stacked_observations=0
    #   -> Conv2d in_channels = 4*(0+1)+0 = 4.  Input NCHW = (2, 4, 16, 16).
    N, CIN, H, W = 2, 4, 16, 16
    x_nchw = jax.random.normal(k_x, (N, CIN, H, W), dtype=jnp.float32)
    x_nhwc = jnp.transpose(x_nchw, (0, 2, 3, 1))          # NCHW -> NHWC (layout glue)

    # HWIO weights; PyTorch's OIHW is the same data transposed (layout glue).
    w1 = 0.1 * jax.random.normal(k_w1, (4, 4, CIN, 32), dtype=jnp.float32)
    w2 = 0.1 * jax.random.normal(k_w2, (4, 4, 32, 64), dtype=jnp.float32)
    w3 = 0.1 * jax.random.normal(k_w3, (3, 3, 64, 64), dtype=jnp.float32)

    out_nhwc = jax.block_until_ready(representation_forward(x_nhwc, w1, w2, w3))
    out_nchw = jnp.transpose(out_nhwc, (0, 3, 1, 2))      # back to PyTorch layout
    assert out_nchw.shape == (N, 64, 4, 4), out_nchw.shape

    # Primary check: matched-precision reference (bf16 MXU operands, f32 accum)
    ref_bf16 = _reference(x_nhwc, w1, w2, w3, matmul_dtype=jnp.bfloat16)
    err = float(jnp.max(jnp.abs(out_nhwc - ref_bf16)))
    assert jnp.allclose(out_nhwc, ref_bf16, atol=2e-3, rtol=2e-3), err

    # Sanity check vs the full-f32 PyTorch-semantics reference (bf16 operand
    # rounding compounds over 3 convs; loose tolerance guards gross errors only).
    ref_f32 = _reference(x_nhwc, w1, w2, w3, matmul_dtype=jnp.float32)
    err32 = float(jnp.max(jnp.abs(out_nhwc - ref_f32)))
    assert jnp.allclose(out_nhwc, ref_f32, atol=3e-1, rtol=5e-2), err32

    print("KERNEL_OK")
</pallas_src>

<mosaic_0001>
module attributes {stable_mosaic.version = 11 : i64} {
  func.func @kernel(%arg0: i32, %arg1: memref<1x64x64xbf16, #tpu.memory_space<vmem>>, %arg2: memref<64x32xbf16, #tpu.memory_space<vmem>>, %arg3: memref<512x64xbf16, #tpu.memory_space<vmem>>, %arg4: memref<576x64xbf16, #tpu.memory_space<vmem>>, %arg5: memref<1x4x256xf32, #tpu.memory_space<vmem>>) attributes {dimension_semantics = [#tpu.dimension_semantics<parallel>], iteration_bounds = array<i64: 2>, scalar_prefetch = 0 : i64, scratch_operands = 0 : i64, tpu.core_type = #tpu.core_type<tc>, window_params = [{transform_indices = @transform_0, window_bounds = array<i64: 1, 64, 64>}, {pipeline_mode = #tpu.pipeline_mode<synchronous>, transform_indices = @transform_1, window_bounds = array<i64: 64, 32>}, {pipeline_mode = #tpu.pipeline_mode<synchronous>, transform_indices = @transform_2, window_bounds = array<i64: 512, 64>}, {pipeline_mode = #tpu.pipeline_mode<synchronous>, transform_indices = @transform_3, window_bounds = array<i64: 576, 64>}, {transform_indices = @transform_4, window_bounds = array<i64: 1, 4, 256>}]} {
    %c0 = arith.constant 0 : index
    %c0_0 = arith.constant 0 : index
    %c0_1 = arith.constant 0 : index
    %0 = vector.load %arg1[%c0, %c0_0, %c0_1] : memref<1x64x64xbf16, #tpu.memory_space<vmem>>, vector<1x64x64xbf16>
    %1 = vector.shape_cast %0 : vector<1x64x64xbf16> to vector<64x64xbf16>
    %c0_2 = arith.constant 0 : index
    %c0_3 = arith.constant 0 : index
    %2 = vector.load %arg2[%c0_2, %c0_3] : memref<64x32xbf16, #tpu.memory_space<vmem>>, vector<64x32xbf16>
    %cst = arith.constant dense<0.000000e+00> : vector<64x32xf32>
    %3 = tpu.matmul %1, %2, %cst {dimension_numbers = #tpu.dot_dimension_numbers<[1], [0], [0], [1], [0, 0, 1, 1], [], []>} : vector<64x64xbf16>, vector<64x32xbf16>, vector<64x32xf32> -> vector<64x32xf32>
    %cst_4 = arith.constant 0.000000e+00 : f32
    %4 = vector.broadcast %cst_4 : f32 to vector<64x32xf32>
    %5 = arith.cmpf ogt, %3, %4 : vector<64x32xf32>
    %cst_5 = arith.constant 0.00999999977 : f32
    %6 = vector.broadcast %cst_5 : f32 to vector<64x32xf32>
    %7 = arith.mulf %6, %3 : vector<64x32xf32>
    %8 = arith.select %5, %3, %7 : vector<64x32xi1>, vector<64x32xf32>
    %9 = vector.extract_strided_slice %8 {offsets = [48, 0], sizes = [16, 32], strides = [1, 1]} : vector<64x32xf32> to vector<16x32xf32>
    %c5_i32 = arith.constant 5 : i32
    %10 = tpu.dynamic_rotate %9 by %c5_i32 dim 0 : vector<16x32xf32>, i32 -> vector<16x32xf32>
    %11 = tpu.iota {dimensions = array<i32: 0>} : vector<16x1xi32>
    %c3_i32 = arith.constant 3 : i32
    %12 = vector.broadcast %c3_i32 : i32 to vector<16x1xi32>
    %13 = arith.andi %11, %12 : vector<16x1xi32>
    %c2_i32 = arith.constant 2 : i32
    %14 = vector.broadcast %c2_i32 : i32 to vector<16x1xi32>
    %15 = arith.shrsi %11, %14 : vector<16x1xi32>
    %c-1_i32 = arith.constant -1 : i32
    %16 = vector.broadcast %c-1_i32 : i32 to vector<16x1xi32>
    %17 = arith.addi %13, %16 : vector<16x1xi32>
    %c0_i32 = arith.constant 0 : i32
    %18 = vector.broadcast %c0_i32 : i32 to vector<16x1xi32>
    %19 = arith.cmpi sge, %17, %18 : vector<16x1xi32>
    %c-1_i32_6 = arith.constant -1 : i32
    %20 = vector.broadcast %c-1_i32_6 : i32 to vector<16x1xi32>
    %21 = arith.addi %13, %20 : vector<16x1xi32>
    %c4_i32 = arith.constant 4 : i32
    %22 = vector.broadcast %c4_i32 : i32 to vector<16x1xi32>
    %23 = arith.cmpi slt, %21, %22 : vector<16x1xi32>
    %24 = arith.andi %19, %23 : vector<16x1xi1>
    %c-1_i32_7 = arith.constant -1 : i32
    %25 = vector.broadcast %c-1_i32_7 : i32 to vector<16x1xi32>
    %26 = arith.addi %15, %25 : vector<16x1xi32>
    %c0_i32_8 = arith.constant 0 : i32
    %27 = vector.broadcast %c0_i32_8 : i32 to vector<16x1xi32>
    %28 = arith.cmpi sge, %26, %27 : vector<16x1xi32>
    %29 = arith.andi %24, %28 : vector<16x1xi1>
    %c-1_i32_9 = arith.constant -1 : i32
    %30 = vector.broadcast %c-1_i32_9 : i32 to vector<16x1xi32>
    %31 = arith.addi %15, %30 : vector<16x1xi32>
    %c4_i32_10 = arith.constant 4 : i32
    %32 = vector.broadcast %c4_i32_10 : i32 to vector<16x1xi32>
    %33 = arith.cmpi slt, %31, %32 : vector<16x1xi32>
    %34 = arith.andi %29, %33 : vector<16x1xi1>
    %cst_11 = arith.constant 0.000000e+00 : f32
    %35 = vector.broadcast %cst_11 : f32 to vector<16x32xf32>
    %36 = vector.shape_cast %34 : vector<16x1xi1> to vector<16x1xi1>
    %37 = vector.broadcast %36 : vector<16x1xi1> to vector<16x32xi1>
    %38 = arith.select %37, %10, %35 : vector<16x32xi1>, vector<16x32xf32>
    %39 = vector.extract_strided_slice %8 {offsets = [32, 0], sizes = [16, 32], strides = [1, 1]} : vector<64x32xf32> to vector<16x32xf32>
    %c1_i32 = arith.constant 1 : i32
    %40 = tpu.dynamic_rotate %39 by %c1_i32 dim 0 : vector<16x32xf32>, i32 -> vector<16x32xf32>
    %41 = tpu.iota {dimensions = array<i32: 0>} : vector<16x1xi32>
    %c3_i32_12 = arith.constant 3 : i32
    %42 = vector.broadcast %c3_i32_12 : i32 to vector<16x1xi32>
    %43 = arith.andi %41, %42 : vector<16x1xi32>
    %c2_i32_13 = arith.constant 2 : i32
    %44 = vector.broadcast %c2_i32_13 : i32 to vector<16x1xi32>
    %45 = arith.shrsi %41, %44 : vector<16x1xi32>
    %c-1_i32_14 = arith.constant -1 : i32
    %46 = vector.broadcast %c-1_i32_14 : i32 to vector<16x1xi32>
    %47 = arith.addi %43, %46 : vector<16x1xi32>
    %c0_i32_15 = arith.constant 0 : i32
    %48 = vector.broadcast %c0_i32_15 : i32 to vector<16x1xi32>
    %49 = arith.cmpi sge, %47, %48 : vector<16x1xi32>
    %c-1_i32_16 = arith.constant -1 : i32
    %50 = vector.broadcast %c-1_i32_16 : i32 to vector<16x1xi32>
    %51 = arith.addi %43, %50 : vector<16x1xi32>
    %c4_i32_17 = arith.constant 4 : i32
    %52 = vector.broadcast %c4_i32_17 : i32 to vector<16x1xi32>
    %53 = arith.cmpi slt, %51, %52 : vector<16x1xi32>
    %54 = arith.andi %49, %53 : vector<16x1xi1>
    %c0_i32_18 = arith.constant 0 : i32
    %55 = vector.broadcast %c0_i32_18 : i32 to vector<16x1xi32>
    %56 = arith.addi %45, %55 : vector<16x1xi32>
    %c0_i32_19 = arith.constant 0 : i32
    %57 = vector.broadcast %c0_i32_19 : i32 to vector<16x1xi32>
    %58 = arith.cmpi sge, %56, %57 : vector<16x1xi32>
    %59 = arith.andi %54, %58 : vector<16x1xi1>
    %c0_i32_20 = arith.constant 0 : i32
    %60 = vector.broadcast %c0_i32_20 : i32 to vector<16x1xi32>
    %61 = arith.addi %45, %60 : vector<16x1xi32>
    %c4_i32_21 = arith.constant 4 : i32
    %62 = vector.broadcast %c4_i32_21 : i32 to vector<16x1xi32>
    %63 = arith.cmpi slt, %61, %62 : vector<16x1xi32>
    %64 = arith.andi %59, %63 : vector<16x1xi1>
    %cst_22 = arith.constant 0.000000e+00 : f32
    %65 = vector.broadcast %cst_22 : f32 to vector<16x32xf32>
    %66 = vector.shape_cast %64 : vector<16x1xi1> to vector<16x1xi1>
    %67 = vector.broadcast %66 : vector<16x1xi1> to vector<16x32xi1>
    %68 = arith.select %67, %40, %65 : vector<16x32xi1>, vector<16x32xf32>
    %69 = vector.extract_strided_slice %8 {offsets = [48, 0], sizes = [16, 32], strides = [1, 1]} : vector<64x32xf32> to vector<16x32xf32>
    %c1_i32_23 = arith.constant 1 : i32
    %70 = tpu.dynamic_rotate %69 by %c1_i32_23 dim 0 : vector<16x32xf32>, i32 -> vector<16x32xf32>
    %71 = tpu.iota {dimensions = array<i32: 0>} : vector<16x1xi32>
    %c3_i32_24 = arith.constant 3 : i32
    %72 = vector.broadcast %c3_i32_24 : i32 to vector<16x1xi32>
    %73 = arith.andi %71, %72 : vector<16x1xi32>
    %c2_i32_25 = arith.constant 2 : i32
    %74 = vector.broadcast %c2_i32_25 : i32 to vector<16x1xi32>
    %75 = arith.shrsi %71, %74 : vector<16x1xi32>
    %c-1_i32_26 = arith.constant -1 : i32
    %76 = vector.broadcast %c-1_i32_26 : i32 to vector<16x1xi32>
    %77 = arith.addi %73, %76 : vector<16x1xi32>
    %c0_i32_27 = arith.constant 0 : i32
    %78 = vector.broadcast %c0_i32_27 : i32 to vector<16x1xi32>
    %79 = arith.cmpi sge, %77, %78 : vector<16x1xi32>
    %c-1_i32_28 = arith.constant -1 : i32
    %80 = vector.broadcast %c-1_i32_28 : i32 to vector<16x1xi32>
    %81 = arith.addi %73, %80 : vector<16x1xi32>
    %c4_i32_29 = arith.constant 4 : i32
    %82 = vector.broadcast %c4_i32_29 : i32 to vector<16x1xi32>
    %83 = arith.cmpi slt, %81, %82 : vector<16x1xi32>
    %84 = arith.andi %79, %83 : vector<16x1xi1>
    %c0_i32_30 = arith.constant 0 : i32
    %85 = vector.broadcast %c0_i32_30 : i32 to vector<16x1xi32>
    %86 = arith.addi %75, %85 : vector<16x1xi32>
    %c0_i32_31 = arith.constant 0 : i32
    %87 = vector.broadcast %c0_i32_31 : i32 to vector<16x1xi32>
    %88 = arith.cmpi sge, %86, %87 : vector<16x1xi32>
    %89 = arith.andi %84, %88 : vector<16x1xi1>
    %c0_i32_32 = arith.constant 0 : i32
    %90 = vector.broadcast %c0_i32_32 : i32 to vector<16x1xi32>
    %91 = arith.addi %75, %90 : vector<16x1xi32>
    %c4_i32_33 = arith.constant 4 : i32
    %92 = vector.broadcast %c4_i32_33 : i32 to vector<16x1xi32>
    %93 = arith.cmpi slt, %91, %92 : vector<16x1xi32>
    %94 = arith.andi %89, %93 : vector<16x1xi1>
    %cst_34 = arith.constant 0.000000e+00 : f32
    %95 = vector.broadcast %cst_34 : f32 to vector<16x32xf32>
    %96 = vector.shape_cast %94 : vector<16x1xi1> to vector<16x1xi1>
    %97 = vector.broadcast %96 : vector<16x1xi1> to vector<16x32xi1>
    %98 = arith.select %97, %70, %95 : vector<16x32xi1>, vector<16x32xf32>
    %99 = vector.extract_strided_slice %8 {offsets = [32, 0], sizes = [16, 32], strides = [1, 1]} : vector<64x32xf32> to vector<16x32xf32>
    %c13_i32 = arith.constant 13 : i32
    %100 = tpu.dynamic_rotate %99 by %c13_i32 dim 0 : vector<16x32xf32>, i32 -> vector<16x32xf32>
    %101 = tpu.iota {dimensions = array<i32: 0>} : vector<16x1xi32>
    %c3_i32_35 = arith.constant 3 : i32
    %102 = vector.broadcast %c3_i32_35 : i32 to vector<16x1xi32>
    %103 = arith.andi %101, %102 : vector<16x1xi32>
    %c2_i32_36 = arith.constant 2 : i32
    %104 = vector.broadcast %c2_i32_36 : i32 to vector<16x1xi32>
    %105 = arith.shrsi %101, %104 : vector<16x1xi32>
    %c-1_i32_37 = arith.constant -1 : i32
    %106 = vector.broadcast %c-1_i32_37 : i32 to vector<16x1xi32>
    %107 = arith.addi %103, %106 : vector<16x1xi32>
    %c0_i32_38 = arith.constant 0 : i32
    %108 = vector.broadcast %c0_i32_38 : i32 to vector<16x1xi32>
    %109 = arith.cmpi sge, %107, %108 : vector<16x1xi32>
    %c-1_i32_39 = arith.constant -1 : i32
    %110 = vector.broadcast %c-1_i32_39 : i32 to vector<16x1xi32>
    %111 = arith.addi %103, %110 : vector<16x1xi32>
    %c4_i32_40 = arith.constant 4 : i32
    %112 = vector.broadcast %c4_i32_40 : i32 to vector<16x1xi32>
    %113 = arith.cmpi slt, %111, %112 : vector<16x1xi32>
    %114 = arith.andi %109, %113 : vector<16x1xi1>
    %c1_i32_41 = arith.constant 1 : i32
    %115 = vector.broadcast %c1_i32_41 : i32 to vector<16x1xi32>
    %116 = arith.addi %105, %115 : vector<16x1xi32>
    %c0_i32_42 = arith.constant 0 : i32
    %117 = vector.broadcast %c0_i32_42 : i32 to vector<16x1xi32>
    %118 = arith.cmpi sge, %116, %117 : vector<16x1xi32>
    %119 = arith.andi %114, %118 : vector<16x1xi1>
    %c1_i32_43 = arith.constant 1 : i32
    %120 = vector.broadcast %c1_i32_43 : i32 to vector<16x1xi32>
    %121 = arith.addi %105, %120 : vector<16x1xi32>
    %c4_i32_44 = arith.constant 4 : i32
    %122 = vector.broadcast %c4_i32_44 : i32 to vector<16x1xi32>
    %123 = arith.cmpi slt, %121, %122 : vector<16x1xi32>
    %124 = arith.andi %119, %123 : vector<16x1xi1>
    %cst_45 = arith.constant 0.000000e+00 : f32
    %125 = vector.broadcast %cst_45 : f32 to vector<16x32xf32>
    %126 = vector.shape_cast %124 : vector<16x1xi1> to vector<16x1xi1>
    %127 = vector.broadcast %126 : vector<16x1xi1> to vector<16x32xi1>
    %128 = arith.select %127, %100, %125 : vector<16x32xi1>, vector<16x32xf32>
    %129 = vector.extract_strided_slice %8 {offsets = [16, 0], sizes = [16, 32], strides = [1, 1]} : vector<64x32xf32> to vector<16x32xf32>
    %c4_i32_46 = arith.constant 4 : i32
    %130 = tpu.dynamic_rotate %129 by %c4_i32_46 dim 0 : vector<16x32xf32>, i32 -> vector<16x32xf32>
    %131 = tpu.iota {dimensions = array<i32: 0>} : vector<16x1xi32>
    %c3_i32_47 = arith.constant 3 : i32
    %132 = vector.broadcast %c3_i32_47 : i32 to vector<16x1xi32>
    %133 = arith.andi %131, %132 : vector<16x1xi32>
    %c2_i32_48 = arith.constant 2 : i32
    %134 = vector.broadcast %c2_i32_48 : i32 to vector<16x1xi32>
    %135 = arith.shrsi %131, %134 : vector<16x1xi32>
    %c0_i32_49 = arith.constant 0 : i32
    %136 = vector.broadcast %c0_i32_49 : i32 to vector<16x1xi32>
    %137 = arith.addi %133, %136 : vector<16x1xi32>
    %c0_i32_50 = arith.constant 0 : i32
    %138 = vector.broadcast %c0_i32_50 : i32 to vector<16x1xi32>
    %139 = arith.cmpi sge, %137, %138 : vector<16x1xi32>
    %c0_i32_51 = arith.constant 0 : i32
    %140 = vector.broadcast %c0_i32_51 : i32 to vector<16x1xi32>
    %141 = arith.addi %133, %140 : vector<16x1xi32>
    %c4_i32_52 = arith.constant 4 : i32
    %142 = vector.broadcast %c4_i32_52 : i32 to vector<16x1xi32>
    %143 = arith.cmpi slt, %141, %142 : vector<16x1xi32>
    %144 = arith.andi %139, %143 : vector<16x1xi1>
    %c-1_i32_53 = arith.constant -1 : i32
    %145 = vector.broadcast %c-1_i32_53 : i32 to vector<16x1xi32>
    %146 = arith.addi %135, %145 : vector<16x1xi32>
    %c0_i32_54 = arith.constant 0 : i32
    %147 = vector.broadcast %c0_i32_54 : i32 to vector<16x1xi32>
    %148 = arith.cmpi sge, %146, %147 : vector<16x1xi32>
    %149 = arith.andi %144, %148 : vector<16x1xi1>
    %c-1_i32_55 = arith.constant -1 : i32
    %150 = vector.broadcast %c-1_i32_55 : i32 to vector<16x1xi32>
    %151 = arith.addi %135, %150 : vector<16x1xi32>
    %c4_i32_56 = arith.constant 4 : i32
    %152 = vector.broadcast %c4_i32_56 : i32 to vector<16x1xi32>
    %153 = arith.cmpi slt, %151, %152 : vector<16x1xi32>
    %154 = arith.andi %149, %153 : vector<16x1xi1>
    %cst_57 = arith.constant 0.000000e+00 : f32
    %155 = vector.broadcast %cst_57 : f32 to vector<16x32xf32>
    %156 = vector.shape_cast %154 : vector<16x1xi1> to vector<16x1xi1>
    %157 = vector.broadcast %156 : vector<16x1xi1> to vector<16x32xi1>
    %158 = arith.select %157, %130, %155 : vector<16x32xi1>, vector<16x32xf32>
    %159 = vector.extract_strided_slice %8 {offsets = [0, 0], sizes = [16, 32], strides = [1, 1]} : vector<64x32xf32> to vector<16x32xf32>
    %160 = vector.extract_strided_slice %8 {offsets = [16, 0], sizes = [16, 32], strides = [1, 1]} : vector<64x32xf32> to vector<16x32xf32>
    %161 = vector.extract_strided_slice %8 {offsets = [0, 0], sizes = [16, 32], strides = [1, 1]} : vector<64x32xf32> to vector<16x32xf32>
    %c12_i32 = arith.constant 12 : i32
    %162 = tpu.dynamic_rotate %161 by %c12_i32 dim 0 : vector<16x32xf32>, i32 -> vector<16x32xf32>
    %163 = tpu.iota {dimensions = array<i32: 0>} : vector<16x1xi32>
    %c3_i32_58 = arith.constant 3 : i32
    %164 = vector.broadcast %c3_i32_58 : i32 to vector<16x1xi32>
    %165 = arith.andi %163, %164 : vector<16x1xi32>
    %c2_i32_59 = arith.constant 2 : i32
    %166 = vector.broadcast %c2_i32_59 : i32 to vector<16x1xi32>
    %167 = arith.shrsi %163, %166 : vector<16x1xi32>
    %c0_i32_60 = arith.constant 0 : i32
    %168 = vector.broadcast %c0_i32_60 : i32 to vector<16x1xi32>
    %169 = arith.addi %165, %168 : vector<16x1xi32>
    %c0_i32_61 = arith.constant 0 : i32
    %170 = vector.broadcast %c0_i32_61 : i32 to vector<16x1xi32>
    %171 = arith.cmpi sge, %169, %170 : vector<16x1xi32>
    %c0_i32_62 = arith.constant 0 : i32
    %172 = vector.broadcast %c0_i32_62 : i32 to vector<16x1xi32>
    %173 = arith.addi %165, %172 : vector<16x1xi32>
    %c4_i32_63 = arith.constant 4 : i32
    %174 = vector.broadcast %c4_i32_63 : i32 to vector<16x1xi32>
    %175 = arith.cmpi slt, %173, %174 : vector<16x1xi32>
    %176 = arith.andi %171, %175 : vector<16x1xi1>
    %c1_i32_64 = arith.constant 1 : i32
    %177 = vector.broadcast %c1_i32_64 : i32 to vector<16x1xi32>
    %178 = arith.addi %167, %177 : vector<16x1xi32>
    %c0_i32_65 = arith.constant 0 : i32
    %179 = vector.broadcast %c0_i32_65 : i32 to vector<16x1xi32>
    %180 = arith.cmpi sge, %178, %179 : vector<16x1xi32>
    %181 = arith.andi %176, %180 : vector<16x1xi1>
    %c1_i32_66 = arith.constant 1 : i32
    %182 = vector.broadcast %c1_i32_66 : i32 to vector<16x1xi32>
    %183 = arith.addi %167, %182 : vector<16x1xi32>
    %c4_i32_67 = arith.constant 4 : i32
    %184 = vector.broadcast %c4_i32_67 : i32 to vector<16x1xi32>
    %185 = arith.cmpi slt, %183, %184 : vector<16x1xi32>
    %186 = arith.andi %181, %185 : vector<16x1xi1>
    %cst_68 = arith.constant 0.000000e+00 : f32
    %187 = vector.broadcast %cst_68 : f32 to vector<16x32xf32>
    %188 = vector.shape_cast %186 : vector<16x1xi1> to vector<16x1xi1>
    %189 = vector.broadcast %188 : vector<16x1xi1> to vector<16x32xi1>
    %190 = arith.select %189, %162, %187 : vector<16x32xi1>, vector<16x32xf32>
    %191 = vector.extract_strided_slice %8 {offsets = [48, 0], sizes = [16, 32], strides = [1, 1]} : vector<64x32xf32> to vector<16x32xf32>
    %c4_i32_69 = arith.constant 4 : i32
    %192 = tpu.dynamic_rotate %191 by %c4_i32_69 dim 0 : vector<16x32xf32>, i32 -> vector<16x32xf32>
    %193 = tpu.iota {dimensions = array<i32: 0>} : vector<16x1xi32>
    %c3_i32_70 = arith.constant 3 : i32
    %194 = vector.broadcast %c3_i32_70 : i32 to vector<16x1xi32>
    %195 = arith.andi %193, %194 : vector<16x1xi32>
    %c2_i32_71 = arith.constant 2 : i32
    %196 = vector.broadcast %c2_i32_71 : i32 to vector<16x1xi32>
    %197 = arith.shrsi %193, %196 : vector<16x1xi32>
    %c0_i32_72 = arith.constant 0 : i32
    %198 = vector.broadcast %c0_i32_72 : i32 to vector<16x1xi32>
    %199 = arith.addi %195, %198 : vector<16x1xi32>
    %c0_i32_73 = arith.constant 0 : i32
    %200 = vector.broadcast %c0_i32_73 : i32 to vector<16x1xi32>
    %201 = arith.cmpi sge, %199, %200 : vector<16x1xi32>
    %c0_i32_74 = arith.constant 0 : i32
    %202 = vector.broadcast %c0_i32_74 : i32 to vector<16x1xi32>
    %203 = arith.addi %195, %202 : vector<16x1xi32>
    %c4_i32_75 = arith.constant 4 : i32
    %204 = vector.broadcast %c4_i32_75 : i32 to vector<16x1xi32>
    %205 = arith.cmpi slt, %203, %204 : vector<16x1xi32>
    %206 = arith.andi %201, %205 : vector<16x1xi1>
    %c-1_i32_76 = arith.constant -1 : i32
    %207 = vector.broadcast %c-1_i32_76 : i32 to vector<16x1xi32>
    %208 = arith.addi %197, %207 : vector<16x1xi32>
    %c0_i32_77 = arith.constant 0 : i32
    %209 = vector.broadcast %c0_i32_77 : i32 to vector<16x1xi32>
    %210 = arith.cmpi sge, %208, %209 : vector<16x1xi32>
    %211 = arith.andi %206, %210 : vector<16x1xi1>
    %c-1_i32_78 = arith.constant -1 : i32
    %212 = vector.broadcast %c-1_i32_78 : i32 to vector<16x1xi32>
    %213 = arith.addi %197, %212 : vector<16x1xi32>
    %c4_i32_79 = arith.constant 4 : i32
    %214 = vector.broadcast %c4_i32_79 : i32 to vector<16x1xi32>
    %215 = arith.cmpi slt, %213, %214 : vector<16x1xi32>
    %216 = arith.andi %211, %215 : vector<16x1xi1>
    %cst_80 = arith.constant 0.000000e+00 : f32
    %217 = vector.broadcast %cst_80 : f32 to vector<16x32xf32>
    %218 = vector.shape_cast %216 : vector<16x1xi1> to vector<16x1xi1>
    %219 = vector.broadcast %218 : vector<16x1xi1> to vector<16x32xi1>
    %220 = arith.select %219, %192, %217 : vector<16x32xi1>, vector<16x32xf32>
    %221 = vector.extract_strided_slice %8 {offsets = [32, 0], sizes = [16, 32], strides = [1, 1]} : vector<64x32xf32> to vector<16x32xf32>
    %222 = vector.extract_strided_slice %8 {offsets = [48, 0], sizes = [16, 32], strides = [1, 1]} : vector<64x32xf32> to vector<16x32xf32>
    %223 = vector.extract_strided_slice %8 {offsets = [32, 0], sizes = [16, 32], strides = [1, 1]} : vector<64x32xf32> to vector<16x32xf32>
    %c12_i32_81 = arith.constant 12 : i32
    %224 = tpu.dynamic_rotate %223 by %c12_i32_81 dim 0 : vector<16x32xf32>, i32 -> vector<16x32xf32>
    %225 = tpu.iota {dimensions = array<i32: 0>} : vector<16x1xi32>
    %c3_i32_82 = arith.constant 3 : i32
    %226 = vector.broadcast %c3_i32_82 : i32 to vector<16x1xi32>
    %227 = arith.andi %225, %226 : vector<16x1xi32>
    %c2_i32_83 = arith.constant 2 : i32
    %228 = vector.broadcast %c2_i32_83 : i32 to vector<16x1xi32>
    %229 = arith.shrsi %225, %228 : vector<16x1xi32>
    %c0_i32_84 = arith.constant 0 : i32
    %230 = vector.broadcast %c0_i32_84 : i32 to vector<16x1xi32>
    %231 = arith.addi %227, %230 : vector<16x1xi32>
    %c0_i32_85 = arith.constant 0 : i32
    %232 = vector.broadcast %c0_i32_85 : i32 to vector<16x1xi32>
    %233 = arith.cmpi sge, %231, %232 : vector<16x1xi32>
    %c0_i32_86 = arith.constant 0 : i32
    %234 = vector.broadcast %c0_i32_86 : i32 to vector<16x1xi32>
    %235 = arith.addi %227, %234 : vector<16x1xi32>
    %c4_i32_87 = arith.constant 4 : i32
    %236 = vector.broadcast %c4_i32_87 : i32 to vector<16x1xi32>
    %237 = arith.cmpi slt, %235, %236 : vector<16x1xi32>
    %238 = arith.andi %233, %237 : vector<16x1xi1>
    %c1_i32_88 = arith.constant 1 : i32
    %239 = vector.broadcast %c1_i32_88 : i32 to vector<16x1xi32>
    %240 = arith.addi %229, %239 : vector<16x1xi32>
    %c0_i32_89 = arith.constant 0 : i32
    %241 = vector.broadcast %c0_i32_89 : i32 to vector<16x1xi32>
    %242 = arith.cmpi sge, %240, %241 : vector<16x1xi32>
    %243 = arith.andi %238, %242 : vector<16x1xi1>
    %c1_i32_90 = arith.constant 1 : i32
    %244 = vector.broadcast %c1_i32_90 : i32 to vector<16x1xi32>
    %245 = arith.addi %229, %244 : vector<16x1xi32>
    %c4_i32_91 = arith.constant 4 : i32
    %246 = vector.broadcast %c4_i32_91 : i32 to vector<16x1xi32>
    %247 = arith.cmpi slt, %245, %246 : vector<16x1xi32>
    %248 = arith.andi %243, %247 : vector<16x1xi1>
    %cst_92 = arith.constant 0.000000e+00 : f32
    %249 = vector.broadcast %cst_92 : f32 to vector<16x32xf32>
    %250 = vector.shape_cast %248 : vector<16x1xi1> to vector<16x1xi1>
    %251 = vector.broadcast %250 : vector<16x1xi1> to vector<16x32xi1>
    %252 = arith.select %251, %224, %249 : vector<16x32xi1>, vector<16x32xf32>
    %253 = vector.extract_strided_slice %8 {offsets = [16, 0], sizes = [16, 32], strides = [1, 1]} : vector<64x32xf32> to vector<16x32xf32>
    %c3_i32_93 = arith.constant 3 : i32
    %254 = tpu.dynamic_rotate %253 by %c3_i32_93 dim 0 : vector<16x32xf32>, i32 -> vector<16x32xf32>
    %255 = tpu.iota {dimensions = array<i32: 0>} : vector<16x1xi32>
    %c3_i32_94 = arith.constant 3 : i32
    %256 = vector.broadcast %c3_i32_94 : i32 to vector<16x1xi32>
    %257 = arith.andi %255, %256 : vector<16x1xi32>
    %c2_i32_95 = arith.constant 2 : i32
    %258 = vector.broadcast %c2_i32_95 : i32 to vector<16x1xi32>
    %259 = arith.shrsi %255, %258 : vector<16x1xi32>
    %c1_i32_96 = arith.constant 1 : i32
    %260 = vector.broadcast %c1_i32_96 : i32 to vector<16x1xi32>
    %261 = arith.addi %257, %260 : vector<16x1xi32>
    %c0_i32_97 = arith.constant 0 : i32
    %262 = vector.broadcast %c0_i32_97 : i32 to vector<16x1xi32>
    %263 = arith.cmpi sge, %261, %262 : vector<16x1xi32>
    %c1_i32_98 = arith.constant 1 : i32
    %264 = vector.broadcast %c1_i32_98 : i32 to vector<16x1xi32>
    %265 = arith.addi %257, %264 : vector<16x1xi32>
    %c4_i32_99 = arith.constant 4 : i32
    %266 = vector.broadcast %c4_i32_99 : i32 to vector<16x1xi32>
    %267 = arith.cmpi slt, %265, %266 : vector<16x1xi32>
    %268 = arith.andi %263, %267 : vector<16x1xi1>
    %c-1_i32_100 = arith.constant -1 : i32
    %269 = vector.broadcast %c-1_i32_100 : i32 to vector<16x1xi32>
    %270 = arith.addi %259, %269 : vector<16x1xi32>
    %c0_i32_101 = arith.constant 0 : i32
    %271 = vector.broadcast %c0_i32_101 : i32 to vector<16x1xi32>
    %272 = arith.cmpi sge, %270, %271 : vector<16x1xi32>
    %273 = arith.andi %268, %272 : vector<16x1xi1>
    %c-1_i32_102 = arith.constant -1 : i32
    %274 = vector.broadcast %c-1_i32_102 : i32 to vector<16x1xi32>
    %275 = arith.addi %259, %274 : vector<16x1xi32>
    %c4_i32_103 = arith.constant 4 : i32
    %276 = vector.broadcast %c4_i32_103 : i32 to vector<16x1xi32>
    %277 = arith.cmpi slt, %275, %276 : vector<16x1xi32>
    %278 = arith.andi %273, %277 : vector<16x1xi1>
    %cst_104 = arith.constant 0.000000e+00 : f32
    %279 = vector.broadcast %cst_104 : f32 to vector<16x32xf32>
    %280 = vector.shape_cast %278 : vector<16x1xi1> to vector<16x1xi1>
    %281 = vector.broadcast %280 : vector<16x1xi1> to vector<16x32xi1>
    %282 = arith.select %281, %254, %279 : vector<16x32xi1>, vector<16x32xf32>
    %283 = vector.extract_strided_slice %8 {offsets = [0, 0], sizes = [16, 32], strides = [1, 1]} : vector<64x32xf32> to vector<16x32xf32>
    %c15_i32 = arith.constant 15 : i32
    %284 = tpu.dynamic_rotate %283 by %c15_i32 dim 0 : vector<16x32xf32>, i32 -> vector<16x32xf32>
    %285 = tpu.iota {dimensions = array<i32: 0>} : vector<16x1xi32>
    %c3_i32_105 = arith.constant 3 : i32
    %286 = vector.broadcast %c3_i32_105 : i32 to vector<16x1xi32>
    %287 = arith.andi %285, %286 : vector<16x1xi32>
    %c2_i32_106 = arith.constant 2 : i32
    %288 = vector.broadcast %c2_i32_106 : i32 to vector<16x1xi32>
    %289 = arith.shrsi %285, %288 : vector<16x1xi32>
    %c1_i32_107 = arith.constant 1 : i32
    %290 = vector.broadcast %c1_i32_107 : i32 to vector<16x1xi32>
    %291 = arith.addi %287, %290 : vector<16x1xi32>
    %c0_i32_108 = arith.constant 0 : i32
    %292 = vector.broadcast %c0_i32_108 : i32 to vector<16x1xi32>
    %293 = arith.cmpi sge, %291, %292 : vector<16x1xi32>
    %c1_i32_109 = arith.constant 1 : i32
    %294 = vector.broadcast %c1_i32_109 : i32 to vector<16x1xi32>
    %295 = arith.addi %287, %294 : vector<16x1xi32>
    %c4_i32_110 = arith.constant 4 : i32
    %296 = vector.broadcast %c4_i32_110 : i32 to vector<16x1xi32>
    %297 = arith.cmpi slt, %295, %296 : vector<16x1xi32>
    %298 = arith.andi %293, %297 : vector<16x1xi1>
    %c0_i32_111 = arith.constant 0 : i32
    %299 = vector.broadcast %c0_i32_111 : i32 to vector<16x1xi32>
    %300 = arith.addi %289, %299 : vector<16x1xi32>
    %c0_i32_112 = arith.constant 0 : i32
    %301 = vector.broadcast %c0_i32_112 : i32 to vector<16x1xi32>
    %302 = arith.cmpi sge, %300, %301 : vector<16x1xi32>
    %303 = arith.andi %298, %302 : vector<16x1xi1>
    %c0_i32_113 = arith.constant 0 : i32
    %304 = vector.broadcast %c0_i32_113 : i32 to vector<16x1xi32>
    %305 = arith.addi %289, %304 : vector<16x1xi32>
    %c4_i32_114 = arith.constant 4 : i32
    %306 = vector.broadcast %c4_i32_114 : i32 to vector<16x1xi32>
    %307 = arith.cmpi slt, %305, %306 : vector<16x1xi32>
    %308 = arith.andi %303, %307 : vector<16x1xi1>
    %cst_115 = arith.constant 0.000000e+00 : f32
    %309 = vector.broadcast %cst_115 : f32 to vector<16x32xf32>
    %310 = vector.shape_cast %308 : vector<16x1xi1> to vector<16x1xi1>
    %311 = vector.broadcast %310 : vector<16x1xi1> to vector<16x32xi1>
    %312 = arith.select %311, %284, %309 : vector<16x32xi1>, vector<16x32xf32>
    %313 = vector.extract_strided_slice %8 {offsets = [16, 0], sizes = [16, 32], strides = [1, 1]} : vector<64x32xf32> to vector<16x32xf32>
    %c15_i32_116 = arith.constant 15 : i32
    %314 = tpu.dynamic_rotate %313 by %c15_i32_116 dim 0 : vector<16x32xf32>, i32 -> vector<16x32xf32>
    %315 = tpu.iota {dimensions = array<i32: 0>} : vector<16x1xi32>
    %c3_i32_117 = arith.constant 3 : i32
    %316 = vector.broadcast %c3_i32_117 : i32 to vector<16x1xi32>
    %317 = arith.andi %315, %316 : vector<16x1xi32>
    %c2_i32_118 = arith.constant 2 : i32
    %318 = vector.broadcast %c2_i32_118 : i32 to vector<16x1xi32>
    %319 = arith.shrsi %315, %318 : vector<16x1xi32>
    %c1_i32_119 = arith.constant 1 : i32
    %320 = vector.broadcast %c1_i32_119 : i32 to vector<16x1xi32>
    %321 = arith.addi %317, %320 : vector<16x1xi32>
    %c0_i32_120 = arith.constant 0 : i32
    %322 = vector.broadcast %c0_i32_120 : i32 to vector<16x1xi32>
    %323 = arith.cmpi sge, %321, %322 : vector<16x1xi32>
    %c1_i32_121 = arith.constant 1 : i32
    %324 = vector.broadcast %c1_i32_121 : i32 to vector<16x1xi32>
    %325 = arith.addi %317, %324 : vector<16x1xi32>
    %c4_i32_122 = arith.constant 4 : i32
    %326 = vector.broadcast %c4_i32_122 : i32 to vector<16x1xi32>
    %327 = arith.cmpi slt, %325, %326 : vector<16x1xi32>
    %328 = arith.andi %323, %327 : vector<16x1xi1>
    %c0_i32_123 = arith.constant 0 : i32
    %329 = vector.broadcast %c0_i32_123 : i32 to vector<16x1xi32>
    %330 = arith.addi %319, %329 : vector<16x1xi32>
    %c0_i32_124 = arith.constant 0 : i32
    %331 = vector.broadcast %c0_i32_124 : i32 to vector<16x1xi32>
    %332 = arith.cmpi sge, %330, %331 : vector<16x1xi32>
    %333 = arith.andi %328, %332 : vector<16x1xi1>
    %c0_i32_125 = arith.constant 0 : i32
    %334 = vector.broadcast %c0_i32_125 : i32 to vector<16x1xi32>
    %335 = arith.addi %319, %334 : vector<16x1xi32>
    %c4_i32_126 = arith.constant 4 : i32
    %336 = vector.broadcast %c4_i32_126 : i32 to vector<16x1xi32>
    %337 = arith.cmpi slt, %335, %336 : vector<16x1xi32>
    %338 = arith.andi %333, %337 : vector<16x1xi1>
    %cst_127 = arith.constant 0.000000e+00 : f32
    %339 = vector.broadcast %cst_127 : f32 to vector<16x32xf32>
    %340 = vector.shape_cast %338 : vector<16x1xi1> to vector<16x1xi1>
    %341 = vector.broadcast %340 : vector<16x1xi1> to vector<16x32xi1>
    %342 = arith.select %341, %314, %339 : vector<16x32xi1>, vector<16x32xf32>
    %343 = vector.extract_strided_slice %8 {offsets = [0, 0], sizes = [16, 32], strides = [1, 1]} : vector<64x32xf32> to vector<16x32xf32>
    %c11_i32 = arith.constant 11 : i32
    %344 = tpu.dynamic_rotate %343 by %c11_i32 dim 0 : vector<16x32xf32>, i32 -> vector<16x32xf32>
    %345 = tpu.iota {dimensions = array<i32: 0>} : vector<16x1xi32>
    %c3_i32_128 = arith.constant 3 : i32
    %346 = vector.broadcast %c3_i32_128 : i32 to vector<16x1xi32>
    %347 = arith.andi %345, %346 : vector<16x1xi32>
    %c2_i32_129 = arith.constant 2 : i32
    %348 = vector.broadcast %c2_i32_129 : i32 to vector<16x1xi32>
    %349 = arith.shrsi %345, %348 : vector<16x1xi32>
    %c1_i32_130 = arith.constant 1 : i32
    %350 = vector.broadcast %c1_i32_130 : i32 to vector<16x1xi32>
    %351 = arith.addi %347, %350 : vector<16x1xi32>
    %c0_i32_131 = arith.constant 0 : i32
    %352 = vector.broadcast %c0_i32_131 : i32 to vector<16x1xi32>
    %353 = arith.cmpi sge, %351, %352 : vector<16x1xi32>
    %c1_i32_132 = arith.constant 1 : i32
    %354 = vector.broadcast %c1_i32_132 : i32 to vector<16x1xi32>
    %355 = arith.addi %347, %354 : vector<16x1xi32>
    %c4_i32_133 = arith.constant 4 : i32
    %356 = vector.broadcast %c4_i32_133 : i32 to vector<16x1xi32>
    %357 = arith.cmpi slt, %355, %356 : vector<16x1xi32>
    %358 = arith.andi %353, %357 : vector<16x1xi1>
    %c1_i32_134 = arith.constant 1 : i32
    %359 = vector.broadcast %c1_i32_134 : i32 to vector<16x1xi32>
    %360 = arith.addi %349, %359 : vector<16x1xi32>
    %c0_i32_135 = arith.constant 0 : i32
    %361 = vector.broadcast %c0_i32_135 : i32 to vector<16x1xi32>
    %362 = arith.cmpi sge, %360, %361 : vector<16x1xi32>
    %363 = arith.andi %358, %362 : vector<16x1xi1>
    %c1_i32_136 = arith.constant 1 : i32
    %364 = vector.broadcast %c1_i32_136 : i32 to vector<16x1xi32>
    %365 = arith.addi %349, %364 : vector<16x1xi32>
    %c4_i32_137 = arith.constant 4 : i32
    %366 = vector.broadcast %c4_i32_137 : i32 to vector<16x1xi32>
    %367 = arith.cmpi slt, %365, %366 : vector<16x1xi32>
    %368 = arith.andi %363, %367 : vector<16x1xi1>
    %cst_138 = arith.constant 0.000000e+00 : f32
    %369 = vector.broadcast %cst_138 : f32 to vector<16x32xf32>
    %370 = vector.shape_cast %368 : vector<16x1xi1> to vector<16x1xi1>
    %371 = vector.broadcast %370 : vector<16x1xi1> to vector<16x32xi1>
    %372 = arith.select %371, %344, %369 : vector<16x32xi1>, vector<16x32xf32>
    %373 = tpu.concatenate %38, %68, %98, %128, %158, %159, %160, %190, %220, %221, %222, %252, %282, %312, %342, %372 in 1 : vector<16x32xf32>, vector<16x32xf32>, vector<16x32xf32>, vector<16x32xf32>, vector<16x32xf32>, vector<16x32xf32>, vector<16x32xf32>, vector<16x32xf32>, vector<16x32xf32>, vector<16x32xf32>, vector<16x32xf32>, vector<16x32xf32>, vector<16x32xf32>, vector<16x32xf32>, vector<16x32xf32>, vector<16x32xf32> -> vector<16x512xf32>
    %374 = arith.truncf %373 : vector<16x512xf32> to vector<16x512xbf16>
    %c0_139 = arith.constant 0 : index
    %c0_140 = arith.constant 0 : index
    %375 = vector.load %arg3[%c0_139, %c0_140] : memref<512x64xbf16, #tpu.memory_space<vmem>>, vector<512x64xbf16>
    %cst_141 = arith.constant dense<0.000000e+00> : vector<16x64xf32>
    %376 = tpu.matmul %374, %375, %cst_141 {dimension_numbers = #tpu.dot_dimension_numbers<[1], [0], [0], [1], [0, 0, 1, 1], [], []>} : vector<16x512xbf16>, vector<512x64xbf16>, vector<16x64xf32> -> vector<16x64xf32>
    %cst_142 = arith.constant 0.000000e+00 : f32
    %377 = vector.broadcast %cst_142 : f32 to vector<16x64xf32>
    %378 = arith.cmpf ogt, %376, %377 : vector<16x64xf32>
    %cst_143 = arith.constant 0.00999999977 : f32
    %379 = vector.broadcast %cst_143 : f32 to vector<16x64xf32>
    %380 = arith.mulf %379, %376 : vector<16x64xf32>
    %381 = arith.select %378, %376, %380 : vector<16x64xi1>, vector<16x64xf32>
    %c5_i32_144 = arith.constant 5 : i32
    %382 = tpu.dynamic_rotate %381 by %c5_i32_144 dim 0 : vector<16x64xf32>, i32 -> vector<16x64xf32>
    %383 = tpu.iota {dimensions = array<i32: 0>} : vector<16x1xi32>
    %c3_i32_145 = arith.constant 3 : i32
    %384 = vector.broadcast %c3_i32_145 : i32 to vector<16x1xi32>
    %385 = arith.andi %383, %384 : vector<16x1xi32>
    %c2_i32_146 = arith.constant 2 : i32
    %386 = vector.broadcast %c2_i32_146 : i32 to vector<16x1xi32>
    %387 = arith.shrsi %383, %386 : vector<16x1xi32>
    %c-1_i32_147 = arith.constant -1 : i32
    %388 = vector.broadcast %c-1_i32_147 : i32 to vector<16x1xi32>
    %389 = arith.addi %385, %388 : vector<16x1xi32>
    %c0_i32_148 = arith.constant 0 : i32
    %390 = vector.broadcast %c0_i32_148 : i32 to vector<16x1xi32>
    %391 = arith.cmpi sge, %389, %390 : vector<16x1xi32>
    %c-1_i32_149 = arith.constant -1 : i32
    %392 = vector.broadcast %c-1_i32_149 : i32 to vector<16x1xi32>
    %393 = arith.addi %385, %392 : vector<16x1xi32>
    %c4_i32_150 = arith.constant 4 : i32
    %394 = vector.broadcast %c4_i32_150 : i32 to vector<16x1xi32>
    %395 = arith.cmpi slt, %393, %394 : vector<16x1xi32>
    %396 = arith.andi %391, %395 : vector<16x1xi1>
    %c-1_i32_151 = arith.constant -1 : i32
    %397 = vector.broadcast %c-1_i32_151 : i32 to vector<16x1xi32>
    %398 = arith.addi %387, %397 : vector<16x1xi32>
    %c0_i32_152 = arith.constant 0 : i32
    %399 = vector.broadcast %c0_i32_152 : i32 to vector<16x1xi32>
    %400 = arith.cmpi sge, %398, %399 : vector<16x1xi32>
    %401 = arith.andi %396, %400 : vector<16x1xi1>
    %c-1_i32_153 = arith.constant -1 : i32
    %402 = vector.broadcast %c-1_i32_153 : i32 to vector<16x1xi32>
    %403 = arith.addi %387, %402 : vector<16x1xi32>
    %c4_i32_154 = arith.constant 4 : i32
    %404 = vector.broadcast %c4_i32_154 : i32 to vector<16x1xi32>
    %405 = arith.cmpi slt, %403, %404 : vector<16x1xi32>
    %406 = arith.andi %401, %405 : vector<16x1xi1>
    %cst_155 = arith.constant 0.000000e+00 : f32
    %407 = vector.broadcast %cst_155 : f32 to vector<16x64xf32>
    %408 = vector.shape_cast %406 : vector<16x1xi1> to vector<16x1xi1>
    %409 = vector.broadcast %408 : vector<16x1xi1> to vector<16x64xi1>
    %410 = arith.select %409, %382, %407 : vector<16x64xi1>, vector<16x64xf32>
    %c1_i32_156 = arith.constant 1 : i32
    %411 = tpu.dynamic_rotate %381 by %c1_i32_156 dim 0 : vector<16x64xf32>, i32 -> vector<16x64xf32>
    %412 = tpu.iota {dimensions = array<i32: 0>} : vector<16x1xi32>
    %c3_i32_157 = arith.constant 3 : i32
    %413 = vector.broadcast %c3_i32_157 : i32 to vector<16x1xi32>
    %414 = arith.andi %412, %413 : vector<16x1xi32>
    %c2_i32_158 = arith.constant 2 : i32
    %415 = vector.broadcast %c2_i32_158 : i32 to vector<16x1xi32>
    %416 = arith.shrsi %412, %415 : vector<16x1xi32>
    %c-1_i32_159 = arith.constant -1 : i32
    %417 = vector.broadcast %c-1_i32_159 : i32 to vector<16x1xi32>
    %418 = arith.addi %414, %417 : vector<16x1xi32>
    %c0_i32_160 = arith.constant 0 : i32
    %419 = vector.broadcast %c0_i32_160 : i32 to vector<16x1xi32>
    %420 = arith.cmpi sge, %418, %419 : vector<16x1xi32>
    %c-1_i32_161 = arith.constant -1 : i32
    %421 = vector.broadcast %c-1_i32_161 : i32 to vector<16x1xi32>
    %422 = arith.addi %414, %421 : vector<16x1xi32>
    %c4_i32_162 = arith.constant 4 : i32
    %423 = vector.broadcast %c4_i32_162 : i32 to vector<16x1xi32>
    %424 = arith.cmpi slt, %422, %423 : vector<16x1xi32>
    %425 = arith.andi %420, %424 : vector<16x1xi1>
    %c0_i32_163 = arith.constant 0 : i32
    %426 = vector.broadcast %c0_i32_163 : i32 to vector<16x1xi32>
    %427 = arith.addi %416, %426 : vector<16x1xi32>
    %c0_i32_164 = arith.constant 0 : i32
    %428 = vector.broadcast %c0_i32_164 : i32 to vector<16x1xi32>
    %429 = arith.cmpi sge, %427, %428 : vector<16x1xi32>
    %430 = arith.andi %425, %429 : vector<16x1xi1>
    %c0_i32_165 = arith.constant 0 : i32
    %431 = vector.broadcast %c0_i32_165 : i32 to vector<16x1xi32>
    %432 = arith.addi %416, %431 : vector<16x1xi32>
    %c4_i32_166 = arith.constant 4 : i32
    %433 = vector.broadcast %c4_i32_166 : i32 to vector<16x1xi32>
    %434 = arith.cmpi slt, %432, %433 : vector<16x1xi32>
    %435 = arith.andi %430, %434 : vector<16x1xi1>
    %cst_167 = arith.constant 0.000000e+00 : f32
    %436 = vector.broadcast %cst_167 : f32 to vector<16x64xf32>
    %437 = vector.shape_cast %435 : vector<16x1xi1> to vector<16x1xi1>
    %438 = vector.broadcast %437 : vector<16x1xi1> to vector<16x64xi1>
    %439 = arith.select %438, %411, %436 : vector<16x64xi1>, vector<16x64xf32>
    %c13_i32_168 = arith.constant 13 : i32
    %440 = tpu.dynamic_rotate %381 by %c13_i32_168 dim 0 : vector<16x64xf32>, i32 -> vector<16x64xf32>
    %441 = tpu.iota {dimensions = array<i32: 0>} : vector<16x1xi32>
    %c3_i32_169 = arith.constant 3 : i32
    %442 = vector.broadcast %c3_i32_169 : i32 to vector<16x1xi32>
    %443 = arith.andi %441, %442 : vector<16x1xi32>
    %c2_i32_170 = arith.constant 2 : i32
    %444 = vector.broadcast %c2_i32_170 : i32 to vector<16x1xi32>
    %445 = arith.shrsi %441, %444 : vector<16x1xi32>
    %c-1_i32_171 = arith.constant -1 : i32
    %446 = vector.broadcast %c-1_i32_171 : i32 to vector<16x1xi32>
    %447 = arith.addi %443, %446 : vector<16x1xi32>
    %c0_i32_172 = arith.constant 0 : i32
    %448 = vector.broadcast %c0_i32_172 : i32 to vector<16x1xi32>
    %449 = arith.cmpi sge, %447, %448 : vector<16x1xi32>
    %c-1_i32_173 = arith.constant -1 : i32
    %450 = vector.broadcast %c-1_i32_173 : i32 to vector<16x1xi32>
    %451 = arith.addi %443, %450 : vector<16x1xi32>
    %c4_i32_174 = arith.constant 4 : i32
    %452 = vector.broadcast %c4_i32_174 : i32 to vector<16x1xi32>
    %453 = arith.cmpi slt, %451, %452 : vector<16x1xi32>
    %454 = arith.andi %449, %453 : vector<16x1xi1>
    %c1_i32_175 = arith.constant 1 : i32
    %455 = vector.broadcast %c1_i32_175 : i32 to vector<16x1xi32>
    %456 = arith.addi %445, %455 : vector<16x1xi32>
    %c0_i32_176 = arith.constant 0 : i32
    %457 = vector.broadcast %c0_i32_176 : i32 to vector<16x1xi32>
    %458 = arith.cmpi sge, %456, %457 : vector<16x1xi32>
    %459 = arith.andi %454, %458 : vector<16x1xi1>
    %c1_i32_177 = arith.constant 1 : i32
    %460 = vector.broadcast %c1_i32_177 : i32 to vector<16x1xi32>
    %461 = arith.addi %445, %460 : vector<16x1xi32>
    %c4_i32_178 = arith.constant 4 : i32
    %462 = vector.broadcast %c4_i32_178 : i32 to vector<16x1xi32>
    %463 = arith.cmpi slt, %461, %462 : vector<16x1xi32>
    %464 = arith.andi %459, %463 : vector<16x1xi1>
    %cst_179 = arith.constant 0.000000e+00 : f32
    %465 = vector.broadcast %cst_179 : f32 to vector<16x64xf32>
    %466 = vector.shape_cast %464 : vector<16x1xi1> to vector<16x1xi1>
    %467 = vector.broadcast %466 : vector<16x1xi1> to vector<16x64xi1>
    %468 = arith.select %467, %440, %465 : vector<16x64xi1>, vector<16x64xf32>
    %c4_i32_180 = arith.constant 4 : i32
    %469 = tpu.dynamic_rotate %381 by %c4_i32_180 dim 0 : vector<16x64xf32>, i32 -> vector<16x64xf32>
    %470 = tpu.iota {dimensions = array<i32: 0>} : vector<16x1xi32>
    %c3_i32_181 = arith.constant 3 : i32
    %471 = vector.broadcast %c3_i32_181 : i32 to vector<16x1xi32>
    %472 = arith.andi %470, %471 : vector<16x1xi32>
    %c2_i32_182 = arith.constant 2 : i32
    %473 = vector.broadcast %c2_i32_182 : i32 to vector<16x1xi32>
    %474 = arith.shrsi %470, %473 : vector<16x1xi32>
    %c0_i32_183 = arith.constant 0 : i32
    %475 = vector.broadcast %c0_i32_183 : i32 to vector<16x1xi32>
    %476 = arith.addi %472, %475 : vector<16x1xi32>
    %c0_i32_184 = arith.constant 0 : i32
    %477 = vector.broadcast %c0_i32_184 : i32 to vector<16x1xi32>
    %478 = arith.cmpi sge, %476, %477 : vector<16x1xi32>
    %c0_i32_185 = arith.constant 0 : i32
    %479 = vector.broadcast %c0_i32_185 : i32 to vector<16x1xi32>
    %480 = arith.addi %472, %479 : vector<16x1xi32>
    %c4_i32_186 = arith.constant 4 : i32
    %481 = vector.broadcast %c4_i32_186 : i32 to vector<16x1xi32>
    %482 = arith.cmpi slt, %480, %481 : vector<16x1xi32>
    %483 = arith.andi %478, %482 : vector<16x1xi1>
    %c-1_i32_187 = arith.constant -1 : i32
    %484 = vector.broadcast %c-1_i32_187 : i32 to vector<16x1xi32>
    %485 = arith.addi %474, %484 : vector<16x1xi32>
    %c0_i32_188 = arith.constant 0 : i32
    %486 = vector.broadcast %c0_i32_188 : i32 to vector<16x1xi32>
    %487 = arith.cmpi sge, %485, %486 : vector<16x1xi32>
    %488 = arith.andi %483, %487 : vector<16x1xi1>
    %c-1_i32_189 = arith.constant -1 : i32
    %489 = vector.broadcast %c-1_i32_189 : i32 to vector<16x1xi32>
    %490 = arith.addi %474, %489 : vector<16x1xi32>
    %c4_i32_190 = arith.constant 4 : i32
    %491 = vector.broadcast %c4_i32_190 : i32 to vector<16x1xi32>
    %492 = arith.cmpi slt, %490, %491 : vector<16x1xi32>
    %493 = arith.andi %488, %492 : vector<16x1xi1>
    %cst_191 = arith.constant 0.000000e+00 : f32
    %494 = vector.broadcast %cst_191 : f32 to vector<16x64xf32>
    %495 = vector.shape_cast %493 : vector<16x1xi1> to vector<16x1xi1>
    %496 = vector.broadcast %495 : vector<16x1xi1> to vector<16x64xi1>
    %497 = arith.select %496, %469, %494 : vector<16x64xi1>, vector<16x64xf32>
    %c12_i32_192 = arith.constant 12 : i32
    %498 = tpu.dynamic_rotate %381 by %c12_i32_192 dim 0 : vector<16x64xf32>, i32 -> vector<16x64xf32>
    %499 = tpu.iota {dimensions = array<i32: 0>} : vector<16x1xi32>
    %c3_i32_193 = arith.constant 3 : i32
    %500 = vector.broadcast %c3_i32_193 : i32 to vector<16x1xi32>
    %501 = arith.andi %499, %500 : vector<16x1xi32>
    %c2_i32_194 = arith.constant 2 : i32
    %502 = vector.broadcast %c2_i32_194 : i32 to vector<16x1xi32>
    %503 = arith.shrsi %499, %502 : vector<16x1xi32>
    %c0_i32_195 = arith.constant 0 : i32
    %504 = vector.broadcast %c0_i32_195 : i32 to vector<16x1xi32>
    %505 = arith.addi %501, %504 : vector<16x1xi32>
    %c0_i32_196 = arith.constant 0 : i32
    %506 = vector.broadcast %c0_i32_196 : i32 to vector<16x1xi32>
    %507 = arith.cmpi sge, %505, %506 : vector<16x1xi32>
    %c0_i32_197 = arith.constant 0 : i32
    %508 = vector.broadcast %c0_i32_197 : i32 to vector<16x1xi32>
    %509 = arith.addi %501, %508 : vector<16x1xi32>
    %c4_i32_198 = arith.constant 4 : i32
    %510 = vector.broadcast %c4_i32_198 : i32 to vector<16x1xi32>
    %511 = arith.cmpi slt, %509, %510 : vector<16x1xi32>
    %512 = arith.andi %507, %511 : vector<16x1xi1>
    %c1_i32_199 = arith.constant 1 : i32
    %513 = vector.broadcast %c1_i32_199 : i32 to vector<16x1xi32>
    %514 = arith.addi %503, %513 : vector<16x1xi32>
    %c0_i32_200 = arith.constant 0 : i32
    %515 = vector.broadcast %c0_i32_200 : i32 to vector<16x1xi32>
    %516 = arith.cmpi sge, %514, %515 : vector<16x1xi32>
    %517 = arith.andi %512, %516 : vector<16x1xi1>
    %c1_i32_201 = arith.constant 1 : i32
    %518 = vector.broadcast %c1_i32_201 : i32 to vector<16x1xi32>
    %519 = arith.addi %503, %518 : vector<16x1xi32>
    %c4_i32_202 = arith.constant 4 : i32
    %520 = vector.broadcast %c4_i32_202 : i32 to vector<16x1xi32>
    %521 = arith.cmpi slt, %519, %520 : vector<16x1xi32>
    %522 = arith.andi %517, %521 : vector<16x1xi1>
    %cst_203 = arith.constant 0.000000e+00 : f32
    %523 = vector.broadcast %cst_203 : f32 to vector<16x64xf32>
    %524 = vector.shape_cast %522 : vector<16x1xi1> to vector<16x1xi1>
    %525 = vector.broadcast %524 : vector<16x1xi1> to vector<16x64xi1>
    %526 = arith.select %525, %498, %523 : vector<16x64xi1>, vector<16x64xf32>
    %c3_i32_204 = arith.constant 3 : i32
    %527 = tpu.dynamic_rotate %381 by %c3_i32_204 dim 0 : vector<16x64xf32>, i32 -> vector<16x64xf32>
    %528 = tpu.iota {dimensions = array<i32: 0>} : vector<16x1xi32>
    %c3_i32_205 = arith.constant 3 : i32
    %529 = vector.broadcast %c3_i32_205 : i32 to vector<16x1xi32>
    %530 = arith.andi %528, %529 : vector<16x1xi32>
    %c2_i32_206 = arith.constant 2 : i32
    %531 = vector.broadcast %c2_i32_206 : i32 to vector<16x1xi32>
    %532 = arith.shrsi %528, %531 : vector<16x1xi32>
    %c1_i32_207 = arith.constant 1 : i32
    %533 = vector.broadcast %c1_i32_207 : i32 to vector<16x1xi32>
    %534 = arith.addi %530, %533 : vector<16x1xi32>
    %c0_i32_208 = arith.constant 0 : i32
    %535 = vector.broadcast %c0_i32_208 : i32 to vector<16x1xi32>
    %536 = arith.cmpi sge, %534, %535 : vector<16x1xi32>
    %c1_i32_209 = arith.constant 1 : i32
    %537 = vector.broadcast %c1_i32_209 : i32 to vector<16x1xi32>
    %538 = arith.addi %530, %537 : vector<16x1xi32>
    %c4_i32_210 = arith.constant 4 : i32
    %539 = vector.broadcast %c4_i32_210 : i32 to vector<16x1xi32>
    %540 = arith.cmpi slt, %538, %539 : vector<16x1xi32>
    %541 = arith.andi %536, %540 : vector<16x1xi1>
    %c-1_i32_211 = arith.constant -1 : i32
    %542 = vector.broadcast %c-1_i32_211 : i32 to vector<16x1xi32>
    %543 = arith.addi %532, %542 : vector<16x1xi32>
    %c0_i32_212 = arith.constant 0 : i32
    %544 = vector.broadcast %c0_i32_212 : i32 to vector<16x1xi32>
    %545 = arith.cmpi sge, %543, %544 : vector<16x1xi32>
    %546 = arith.andi %541, %545 : vector<16x1xi1>
    %c-1_i32_213 = arith.constant -1 : i32
    %547 = vector.broadcast %c-1_i32_213 : i32 to vector<16x1xi32>
    %548 = arith.addi %532, %547 : vector<16x1xi32>
    %c4_i32_214 = arith.constant 4 : i32
    %549 = vector.broadcast %c4_i32_214 : i32 to vector<16x1xi32>
    %550 = arith.cmpi slt, %548, %549 : vector<16x1xi32>
    %551 = arith.andi %546, %550 : vector<16x1xi1>
    %cst_215 = arith.constant 0.000000e+00 : f32
    %552 = vector.broadcast %cst_215 : f32 to vector<16x64xf32>
    %553 = vector.shape_cast %551 : vector<16x1xi1> to vector<16x1xi1>
    %554 = vector.broadcast %553 : vector<16x1xi1> to vector<16x64xi1>
    %555 = arith.select %554, %527, %552 : vector<16x64xi1>, vector<16x64xf32>
    %c15_i32_216 = arith.constant 15 : i32
    %556 = tpu.dynamic_rotate %381 by %c15_i32_216 dim 0 : vector<16x64xf32>, i32 -> vector<16x64xf32>
    %557 = tpu.iota {dimensions = array<i32: 0>} : vector<16x1xi32>
    %c3_i32_217 = arith.constant 3 : i32
    %558 = vector.broadcast %c3_i32_217 : i32 to vector<16x1xi32>
    %559 = arith.andi %557, %558 : vector<16x1xi32>
    %c2_i32_218 = arith.constant 2 : i32
    %560 = vector.broadcast %c2_i32_218 : i32 to vector<16x1xi32>
    %561 = arith.shrsi %557, %560 : vector<16x1xi32>
    %c1_i32_219 = arith.constant 1 : i32
    %562 = vector.broadcast %c1_i32_219 : i32 to vector<16x1xi32>
    %563 = arith.addi %559, %562 : vector<16x1xi32>
    %c0_i32_220 = arith.constant 0 : i32
    %564 = vector.broadcast %c0_i32_220 : i32 to vector<16x1xi32>
    %565 = arith.cmpi sge, %563, %564 : vector<16x1xi32>
    %c1_i32_221 = arith.constant 1 : i32
    %566 = vector.broadcast %c1_i32_221 : i32 to vector<16x1xi32>
    %567 = arith.addi %559, %566 : vector<16x1xi32>
    %c4_i32_222 = arith.constant 4 : i32
    %568 = vector.broadcast %c4_i32_222 : i32 to vector<16x1xi32>
    %569 = arith.cmpi slt, %567, %568 : vector<16x1xi32>
    %570 = arith.andi %565, %569 : vector<16x1xi1>
    %c0_i32_223 = arith.constant 0 : i32
    %571 = vector.broadcast %c0_i32_223 : i32 to vector<16x1xi32>
    %572 = arith.addi %561, %571 : vector<16x1xi32>
    %c0_i32_224 = arith.constant 0 : i32
    %573 = vector.broadcast %c0_i32_224 : i32 to vector<16x1xi32>
    %574 = arith.cmpi sge, %572, %573 : vector<16x1xi32>
    %575 = arith.andi %570, %574 : vector<16x1xi1>
    %c0_i32_225 = arith.constant 0 : i32
    %576 = vector.broadcast %c0_i32_225 : i32 to vector<16x1xi32>
    %577 = arith.addi %561, %576 : vector<16x1xi32>
    %c4_i32_226 = arith.constant 4 : i32
    %578 = vector.broadcast %c4_i32_226 : i32 to vector<16x1xi32>
    %579 = arith.cmpi slt, %577, %578 : vector<16x1xi32>
    %580 = arith.andi %575, %579 : vector<16x1xi1>
    %cst_227 = arith.constant 0.000000e+00 : f32
    %581 = vector.broadcast %cst_227 : f32 to vector<16x64xf32>
    %582 = vector.shape_cast %580 : vector<16x1xi1> to vector<16x1xi1>
    %583 = vector.broadcast %582 : vector<16x1xi1> to vector<16x64xi1>
    %584 = arith.select %583, %556, %581 : vector<16x64xi1>, vector<16x64xf32>
    %c11_i32_228 = arith.constant 11 : i32
    %585 = tpu.dynamic_rotate %381 by %c11_i32_228 dim 0 : vector<16x64xf32>, i32 -> vector<16x64xf32>
    %586 = tpu.iota {dimensions = array<i32: 0>} : vector<16x1xi32>
    %c3_i32_229 = arith.constant 3 : i32
    %587 = vector.broadcast %c3_i32_229 : i32 to vector<16x1xi32>
    %588 = arith.andi %586, %587 : vector<16x1xi32>
    %c2_i32_230 = arith.constant 2 : i32
    %589 = vector.broadcast %c2_i32_230 : i32 to vector<16x1xi32>
    %590 = arith.shrsi %586, %589 : vector<16x1xi32>
    %c1_i32_231 = arith.constant 1 : i32
    %591 = vector.broadcast %c1_i32_231 : i32 to vector<16x1xi32>
    %592 = arith.addi %588, %591 : vector<16x1xi32>
    %c0_i32_232 = arith.constant 0 : i32
    %593 = vector.broadcast %c0_i32_232 : i32 to vector<16x1xi32>
    %594 = arith.cmpi sge, %592, %593 : vector<16x1xi32>
    %c1_i32_233 = arith.constant 1 : i32
    %595 = vector.broadcast %c1_i32_233 : i32 to vector<16x1xi32>
    %596 = arith.addi %588, %595 : vector<16x1xi32>
    %c4_i32_234 = arith.constant 4 : i32
    %597 = vector.broadcast %c4_i32_234 : i32 to vector<16x1xi32>
    %598 = arith.cmpi slt, %596, %597 : vector<16x1xi32>
    %599 = arith.andi %594, %598 : vector<16x1xi1>
    %c1_i32_235 = arith.constant 1 : i32
    %600 = vector.broadcast %c1_i32_235 : i32 to vector<16x1xi32>
    %601 = arith.addi %590, %600 : vector<16x1xi32>
    %c0_i32_236 = arith.constant 0 : i32
    %602 = vector.broadcast %c0_i32_236 : i32 to vector<16x1xi32>
    %603 = arith.cmpi sge, %601, %602 : vector<16x1xi32>
    %604 = arith.andi %599, %603 : vector<16x1xi1>
    %c1_i32_237 = arith.constant 1 : i32
    %605 = vector.broadcast %c1_i32_237 : i32 to vector<16x1xi32>
    %606 = arith.addi %590, %605 : vector<16x1xi32>
    %c4_i32_238 = arith.constant 4 : i32
    %607 = vector.broadcast %c4_i32_238 : i32 to vector<16x1xi32>
    %608 = arith.cmpi slt, %606, %607 : vector<16x1xi32>
    %609 = arith.andi %604, %608 : vector<16x1xi1>
    %cst_239 = arith.constant 0.000000e+00 : f32
    %610 = vector.broadcast %cst_239 : f32 to vector<16x64xf32>
    %611 = vector.shape_cast %609 : vector<16x1xi1> to vector<16x1xi1>
    %612 = vector.broadcast %611 : vector<16x1xi1> to vector<16x64xi1>
    %613 = arith.select %612, %585, %610 : vector<16x64xi1>, vector<16x64xf32>
    %614 = tpu.concatenate %410, %439, %468, %497, %381, %526, %555, %584, %613 in 1 : vector<16x64xf32>, vector<16x64xf32>, vector<16x64xf32>, vector<16x64xf32>, vector<16x64xf32>, vector<16x64xf32>, vector<16x64xf32>, vector<16x64xf32>, vector<16x64xf32> -> vector<16x576xf32>
    %615 = arith.truncf %614 : vector<16x576xf32> to vector<16x576xbf16>
    %c0_240 = arith.constant 0 : index
    %c0_241 = arith.constant 0 : index
    %616 = vector.load %arg4[%c0_240, %c0_241] : memref<576x64xbf16, #tpu.memory_space<vmem>>, vector<576x64xbf16>
    %cst_242 = arith.constant dense<0.000000e+00> : vector<16x64xf32>
    %617 = tpu.matmul %615, %616, %cst_242 {dimension_numbers = #tpu.dot_dimension_numbers<[1], [0], [0], [1], [0, 0, 1, 1], [], []>} : vector<16x576xbf16>, vector<576x64xbf16>, vector<16x64xf32> -> vector<16x64xf32>
    %cst_243 = arith.constant 0.000000e+00 : f32
    %618 = vector.broadcast %cst_243 : f32 to vector<16x64xf32>
    %619 = arith.cmpf ogt, %617, %618 : vector<16x64xf32>
    %cst_244 = arith.constant 0.00999999977 : f32
    %620 = vector.broadcast %cst_244 : f32 to vector<16x64xf32>
    %621 = arith.mulf %620, %617 : vector<16x64xf32>
    %622 = arith.select %619, %617, %621 : vector<16x64xi1>, vector<16x64xf32>
    %623 = vector.extract_strided_slice %622 {offsets = [0, 0], sizes = [4, 64], strides = [1, 1]} : vector<16x64xf32> to vector<4x64xf32>
    %c12_i32_245 = arith.constant 12 : i32
    %624 = tpu.dynamic_rotate %622 by %c12_i32_245 dim 0 : vector<16x64xf32>, i32 -> vector<16x64xf32>
    %625 = vector.extract_strided_slice %624 {offsets = [0, 0], sizes = [4, 64], strides = [1, 1]} : vector<16x64xf32> to vector<4x64xf32>
    %c8_i32 = arith.constant 8 : i32
    %626 = tpu.dynamic_rotate %622 by %c8_i32 dim 0 : vector<16x64xf32>, i32 -> vector<16x64xf32>
    %627 = vector.extract_strided_slice %626 {offsets = [0, 0], sizes = [4, 64], strides = [1, 1]} : vector<16x64xf32> to vector<4x64xf32>
    %c4_i32_246 = arith.constant 4 : i32
    %628 = tpu.dynamic_rotate %622 by %c4_i32_246 dim 0 : vector<16x64xf32>, i32 -> vector<16x64xf32>
    %629 = vector.extract_strided_slice %628 {offsets = [0, 0], sizes = [4, 64], strides = [1, 1]} : vector<16x64xf32> to vector<4x64xf32>
    %630 = tpu.concatenate %623, %625, %627, %629 in 1 : vector<4x64xf32>, vector<4x64xf32>, vector<4x64xf32>, vector<4x64xf32> -> vector<4x256xf32>
    %c0_247 = arith.constant 0 : index
    %c0_248 = arith.constant 0 : index
    %c0_249 = arith.constant 0 : index
    %631 = vector.load %arg5[%c0_247, %c0_248, %c0_249] : memref<1x4x256xf32, #tpu.memory_space<vmem>>, vector<1x4x256xf32>
    %632 = vector.shape_cast %631 : vector<1x4x256xf32> to vector<4x256xf32>
    %633 = vector.shape_cast %630 : vector<4x256xf32> to vector<1x4x256xf32>
    tpu.vector_store %arg5[%c0_247, %c0_248, %c0_249], %633 {strides = array<i32>} : memref<1x4x256xf32, #tpu.memory_space<vmem>>, vector<1x4x256xf32>,
    return
  }
  func.func @transform_0(%arg0: i32) -> (i32, i32, i32) {
    %c0_i32 = arith.constant 0 : i32
    %c0_i32_0 = arith.constant 0 : i32
    %c0_i32_1 = arith.constant 0 : i32
    return %arg0, %c0_i32, %c0_i32_0 : i32, i32, i32
  }
  func.func @transform_1(%arg0: i32) -> (i32, i32) {
    %c0_i32 = arith.constant 0 : i32
    %c0_i32_0 = arith.constant 0 : i32
    %c0_i32_1 = arith.constant 0 : i32
    return %c0_i32, %c0_i32_0 : i32, i32
  }
  func.func @transform_2(%arg0: i32) -> (i32, i32) {
    %c0_i32 = arith.constant 0 : i32
    %c0_i32_0 = arith.constant 0 : i32
    %c0_i32_1 = arith.constant 0 : i32
    return %c0_i32, %c0_i32_0 : i32, i32
  }
  func.func @transform_3(%arg0: i32) -> (i32, i32) {
    %c0_i32 = arith.constant 0 : i32
    %c0_i32_0 = arith.constant 0 : i32
    %c0_i32_1 = arith.constant 0 : i32
    return %c0_i32, %c0_i32_0 : i32, i32
  }
  func.func @transform_4(%arg0: i32) -> (i32, i32, i32) {
    %c0_i32 = arith.constant 0 : i32
    %c0_i32_0 = arith.constant 0 : i32
    %c0_i32_1 = arith.constant 0 : i32
    return %arg0, %c0_i32, %c0_i32_0 : i32, i32, i32
  }
}

</mosaic_0001>

<llo_original>
// kernel: tpu_custom_call.1
$region0: #{tpu_custom_call.1}
  #allocation0 [shape = 'u32[]', space=smem, size = 0x4, offset = 0x4, fixed_abs, tag = 'smem constant byte address 0x4 - core index']
  #allocation1 [shape = 'u32[144,128]{1,0:T(1,128)}', space=vmem, size = 0x12000, scoped, tag = 'internal scratch']
  %s0 = inlined_call_operand.vmem [shape: bf16[2,64,64], index: 0, kind: input, shape index: {}]
  %s1 = inlined_call_operand.vmem [shape: bf16[64,32], index: 1, kind: input, shape index: {}]
  %s2 = inlined_call_operand.vmem [shape: bf16[512,64], index: 2, kind: input, shape index: {}]
  %s3 = inlined_call_operand.vmem [shape: bf16[576,64], index: 3, kind: input, shape index: {}]
  %s4 = inlined_call_operand.hbm [shape: f32[2,4,256], index: 4, kind: output, shape index: {}]
  %s5 = sld [smem:[#allocation0]]
  $region49: #{tpu_custom_call.1} parent=0
    _
  %s7 = ssub.s32 1, %s5
  %s8 = scalar_select 0, %s7, %s5
  $region1: #{tpu_custom_call.1} parent=0
    #allocation2 [shape = 'u8[8192]{0}', space=vmem, size = 0x2000, scoped, tag = 'output window, operand 0']
    #allocation3 [shape = 's32[2]{0}', space=sflag, size = 0x8, scoped, tag = 'scoped memory for tpu_custom_call.1']
    %9 = vsyncpa [#allocation3], 0
    %s10 = scalar_lea.sflag [#allocation3], 1
    %11 = vsyncpa %s10, 0
    loop: start=0, step=1, limit=4
    $region2: #{tpu_custom_call.1} parent=1 // loop_pre_header
      _
    $region3: #{tpu_custom_call.1} parent=1 // loop_header
      %s13 = sphi 0, %s17
      %p14 = scmp.ge.s32.totalorder %s13, 4
      %s23 = sphi 0, %s25
      %s26 = sphi 0, %s23
      %s27 = sphi 0, %s26
      %s43 = sphi 0, %s27
      %s47 = sphi 0, %s47
      %s49 = sphi 0, %s47
      %s50 = sphi 0, %s49
      %s64 = sphi 0, %s50
      %s68 = sphi 0, %s68
      %s70 = sphi 0, %s68
      %s71 = sphi 0, %s70
      %s85 = sphi 0, %s71
      %s89 = sphi 0, %s89
      %s91 = sphi 0, %s89
      %s92 = sphi 0, %s91
      %s106 = sphi 0, %s92
      %s112 = sphi 0, %s114
      %s115 = sphi 0, %s112
      %s116 = sphi 0, %s115
      %s132 = sphi 0, %s116
    $region4: #{tpu_custom_call.1} parent=1 // loop_header_branch
      %16 = sbr.rel (%p14) target = $region8
    $region5: #{tpu_custom_call.1} parent=1 // loop_body
      %s18 = ssub.s32 %s13, 1
      %s19 = ssub.s32 %s13, 2
      %s20 = sadd.s32 %s13, 1
      %s21 = ssub.s32 %s13, %s20
      %p22 = scmp.eq.s32.totalorder %s21, 0
      %s24 = sadd.s32 %s23, 1
      %s25 = scalar_select %p22, %s23, %s24
      %p28 = pneg %p22
      %p29 = scmp.eq.s32.totalorder %s13, 1
      %p30 = por %p28, %p29
      %p31 = scmp.ne.s32.totalorder %s23, %s26
      %p32 = scmp.eq.s32.totalorder %s13, 0
      %p33 = por %p31, %p32
      %p34 = scmp.ne.s32.totalorder %s23, %s26
      %p35 = scmp.eq.s32.totalorder %s18, 1
      %p36 = por %p34, %p35
      %p37 = scmp.ne.s32.totalorder %s26, %s27
      %p38 = scmp.eq.s32.totalorder %s18, 0
      %p39 = por %p37, %p38
      %p40 = scmp.ne.s32.totalorder %s26, %s27
      %p41 = scmp.eq.s32.totalorder %s19, 1
      %p42 = por %p40, %p41
      %p44 = scmp.ne.s32.totalorder %s27, %s43
      %p45 = scmp.eq.s32.totalorder %s19, 0
      %p46 = por %p44, %p45
      %s48 = sadd.s32 %s47, 1
      %p51 = scmp.eq.s32.totalorder %s13, 1
      %p52 = scmp.ne.s32.totalorder %s47, %s49
      %p53 = scmp.eq.s32.totalorder %s13, 0
      %p54 = por %p52, %p53
      %p55 = scmp.ne.s32.totalorder %s47, %s49
      %p56 = scmp.eq.s32.totalorder %s18, 1
      %p57 = por %p55, %p56
      %p58 = scmp.ne.s32.totalorder %s49, %s50
      %p59 = scmp.eq.s32.totalorder %s18, 0
      %p60 = por %p58, %p59
      %p61 = scmp.ne.s32.totalorder %s49, %s50
      %p62 = scmp.eq.s32.totalorder %s19, 1
      %p63 = por %p61, %p62
      %p65 = scmp.ne.s32.totalorder %s50, %s64
      %p66 = scmp.eq.s32.totalorder %s19, 0
      %p67 = por %p65, %p66
      %s69 = sadd.s32 %s68, 1
      %p72 = scmp.eq.s32.totalorder %s13, 1
      %p73 = scmp.ne.s32.totalorder %s68, %s70
      %p74 = scmp.eq.s32.totalorder %s13, 0
      %p75 = por %p73, %p74
      %p76 = scmp.ne.s32.totalorder %s68, %s70
      %p77 = scmp.eq.s32.totalorder %s18, 1
      %p78 = por %p76, %p77
      %p79 = scmp.ne.s32.totalorder %s70, %s71
      %p80 = scmp.eq.s32.totalorder %s18, 0
      %p81 = por %p79, %p80
      %p82 = scmp.ne.s32.totalorder %s70, %s71
      %p83 = scmp.eq.s32.totalorder %s19, 1
      %p84 = por %p82, %p83
      %p86 = scmp.ne.s32.totalorder %s71, %s85
      %p87 = scmp.eq.s32.totalorder %s19, 0
      %p88 = por %p86, %p87
      %s90 = sadd.s32 %s89, 1
      %p93 = scmp.eq.s32.totalorder %s13, 1
      %p94 = scmp.ne.s32.totalorder %s89, %s91
      %p95 = scmp.eq.s32.totalorder %s13, 0
      %p96 = por %p94, %p95
      %p97 = scmp.ne.s32.totalorder %s89, %s91
      %p98 = scmp.eq.s32.totalorder %s18, 1
      %p99 = por %p97, %p98
      %p100 = scmp.ne.s32.totalorder %s91, %s92
      %p101 = scmp.eq.s32.totalorder %s18, 0
      %p102 = por %p100, %p101
      %p103 = scmp.ne.s32.totalorder %s91, %s92
      %p104 = scmp.eq.s32.totalorder %s19, 1
      %p105 = por %p103, %p104
      %p107 = scmp.ne.s32.totalorder %s92, %s106
      %p108 = scmp.eq.s32.totalorder %s19, 0
      %p109 = por %p107, %p108
      %s110 = ssub.s32 %s13, %s20
      %p111 = scmp.eq.s32.totalorder %s110, 0
      %s113 = sadd.s32 %s112, 1
      %s114 = scalar_select %p111, %s112, %s113
      %p117 = pneg %p111
      %p118 = scmp.eq.s32.totalorder %s13, 1
      %p119 = por %p117, %p118
      %p120 = scmp.ne.s32.totalorder %s112, %s115
      %p121 = scmp.eq.s32.totalorder %s13, 0
      %p122 = por %p120, %p121
      %p123 = scmp.ne.s32.totalorder %s112, %s115
      %p124 = scmp.eq.s32.totalorder %s18, 1
      %p125 = por %p123, %p124
      %p126 = scmp.ne.s32.totalorder %s115, %s116
      %p127 = scmp.eq.s32.totalorder %s18, 0
      %p128 = por %p126, %p127
      %p129 = scmp.ne.s32.totalorder %s115, %s116
      %p130 = scmp.eq.s32.totalorder %s19, 1
      %p131 = por %p129, %p130
      %p133 = scmp.ne.s32.totalorder %s116, %s132
      %p134 = scmp.eq.s32.totalorder %s19, 0
      %p135 = por %p133, %p134
      %p136 = scmp.le.s32.totalorder 1, %s13
      %p137 = scmp.lt.s32.totalorder %s13, 3
      %p138 = pnand %p136, %p137
      %p139 = pneg %p138
      // Predicated region
      $region9: #{tpu_custom_call.1} parent=5 // pred_check
        _
      $region10: #{tpu_custom_call.1} parent=5 // pred_check_branch
        %141 = sbr.rel (%p138) target = $region12
      $region11: #{tpu_custom_call.1} parent=5 // pred_region
        %s142 = ssub.s32 %s13, 1
        // Predicated region
        $region13: #{tpu_custom_call.1} parent=11 // pred_check
          %p143 = pneg %p60
        $region14: #{tpu_custom_call.1} parent=11 // pred_check_branch
          %145 = sbr.rel (%p143) target = $region16
        $region15: #{tpu_custom_call.1} parent=11 // pred_region
          _
        $region16: #{tpu_custom_call.1} parent=11 // pred_fallthru
          _
        // Predicated region
        $region17: #{tpu_custom_call.1} parent=11 // pred_check
          %p146 = pneg %p81
        $region18: #{tpu_custom_call.1} parent=11 // pred_check_branch
          %148 = sbr.rel (%p146) target = $region20
        $region19: #{tpu_custom_call.1} parent=11 // pred_region
          _
        $region20: #{tpu_custom_call.1} parent=11 // pred_fallthru
          _
        // Predicated region
        $region21: #{tpu_custom_call.1} parent=11 // pred_check
          %p149 = pneg %p102
        $region22: #{tpu_custom_call.1} parent=11 // pred_check_branch
          %151 = sbr.rel (%p149) target = $region24
        $region23: #{tpu_custom_call.1} parent=11 // pred_region
          _
        $region24: #{tpu_custom_call.1} parent=11 // pred_fallthru
          _
      $region12: #{tpu_custom_call.1} parent=5 // pred_fallthru
        _
      %p152 = scmp.lt.s32.totalorder %s13, 2
      // Predicated region
      $region25: #{tpu_custom_call.1} parent=5 // pred_check
        %p153 = pneg %p152
      $region26: #{tpu_custom_call.1} parent=5 // pred_check_branch
        %155 = sbr.rel (%p153) target = $region28
      $region27: #{tpu_custom_call.1} parent=5 // pred_region
        // Predicated region
        $region29: #{tpu_custom_call.1} parent=27 // pred_check
          %p156 = pneg %p33
        $region30: #{tpu_custom_call.1} parent=27 // pred_check_branch
          %158 = sbr.rel (%p156) target = $region32
        $region31: #{tpu_custom_call.1} parent=27 // pred_region
          %p159 = scmp.lt.s32.totalorder %s13, 1
          %s160 = scalar_select %p159, %s13, 1
          %s161 = smul.addr %s160, 8
          %s162 = smul.addr %s161, 4
          %s163 = scalar_lea.vmem %s0, %s162
        $region32: #{tpu_custom_call.1} parent=27 // pred_fallthru
          _
      $region28: #{tpu_custom_call.1} parent=5 // pred_fallthru
        _
      %p164 = scmp.le.s32.totalorder 1, %s13
      %p165 = scmp.lt.s32.totalorder %s13, 3
      %p166 = pnand %p164, %p165
      %p167 = pneg %p166
      // Predicated region
      $region33: #{tpu_custom_call.1} parent=5 // pred_check
        _
      $region34: #{tpu_custom_call.1} parent=5 // pred_check_branch
        %169 = sbr.rel (%p166) target = $region36
      $region35: #{tpu_custom_call.1} parent=5 // pred_region
        %s170 = ssub.s32 %s13, 1
        %p171 = scmp.lt.s32.totalorder %s18, 1
        %s172 = scalar_select %p171, %s18, 1
        %s173 = smul.addr %s172, 8
        %s174 = smul.addr %s173, 4
        %s175 = scalar_lea.vmem %s0, %s174
        %p176 = pneg %p39
        %p177 = pneg %p36
        %p178 = pneg %p60
        %p179 = pneg %p57
        %p180 = pneg %p81
        %p181 = pneg %p78
        %p182 = pneg %p102
        %p183 = pneg %p99
        %p184 = pneg %p128
        %p185 = pneg %p125
        %s186 = sand.u32 %s115, 1
        %s187 = scalar_lea.sflag [#allocation3], %s186
        %s188 = sand.u32 %s115, 1
        %s189 = smul.addr %s188, 8
        %s190 = scalar_lea.vmem [#allocation2], %s189
        %p191 = scmp.lt.s32.totalorder %s18, 1
        %s192 = scalar_select %p191, %s18, 1
        %s193 = smul.addr %s192, 8
        %s194 = smul.addr %s193, 4
        %s195 = scalar_lea.vmem %s0, %s194
        %v197 = vld [vmem:[%s195] sm:$0xf]
        %v198 = vld [vmem:[%s195 + $0x4] sm:$0xf]
        %v199 = vld [vmem:[%s195 + $0x8] sm:$0xf]
        %v200 = vld [vmem:[%s195 + $0xc] sm:$0xf]
        %v201 = vld [vmem:[%s195 + $0x10] sm:$0xf]
        %v202 = vld [vmem:[%s195 + $0x14] sm:$0xf]
        %v203 = vld [vmem:[%s195 + $0x18] sm:$0xf]
        %v204 = vld [vmem:[%s195 + $0x1c] sm:$0xf]
        %v205 = vld [vmem:[%s1] sm:$0xf]
        %v206 = vld [vmem:[%s1 + $0x4] sm:$0xf]
        %v207 = vld [vmem:[%s1 + $0x8] sm:$0xf]
        %v208 = vld [vmem:[%s1 + $0xc] sm:$0xf]
        %v209 = vld [vmem:[%s1 + $0x10] sm:$0xf]
        %v210 = vld [vmem:[%s1 + $0x14] sm:$0xf]
        %v211 = vld [vmem:[%s1 + $0x18] sm:$0xf]
        %v212 = vld [vmem:[%s1 + $0x1c] sm:$0xf]
        %v221 = vunpack.c.l.b16 %v197
        %v222 = vunpack.c.l.b16 %v198
        %v223 = vunpack.c.l.b16 %v199
        %v224 = vunpack.c.l.b16 %v200
        %v225 = vunpack.c.l.b16 %v201
        %v226 = vunpack.c.l.b16 %v202
        %v227 = vunpack.c.l.b16 %v203
        %v228 = vunpack.c.l.b16 %v204
        %v229 = vpack.c.b16 %v222, %v221
        %v230 = vpack.c.b16 %v224, %v223
        %v231 = vpack.c.b16 %v226, %v225
        %v232 = vpack.c.b16 %v228, %v227
        %v241 = vunpack.c.l.b16 %v205
        %v242 = vunpack.c.l.b16 %v206
        %v243 = vunpack.c.l.b16 %v207
        %v244 = vunpack.c.l.b16 %v208
        %v245 = vunpack.c.l.b16 %v209
        %v246 = vunpack.c.l.b16 %v210
        %v247 = vunpack.c.l.b16 %v211
        %v248 = vunpack.c.l.b16 %v212
        %v249 = vpack.c.b16 %v242, %v241
        %v250 = vpack.c.b16 %v244, %v243
        %v251 = vpack.c.b16 %v246, %v245
        %v252 = vpack.c.b16 %v248, %v247
        %vm257 = vcmask 523264
        %v259 = vsel %vm257, %v229, 0
        %v262 = vsel %vm257, %v230, 0
        %v265 = vsel %vm257, %v231, 0
        %v268 = vsel %vm257, %v232, 0
        %270 = vmatprep.subr.bf16.mxu0 0
        %271 = vmatpush1.bf16.msra.mxu0 %v249
        %272 = vmatprep.subr.bf16.mxu0 0
        %273 = vmatpush1.bf16.msra.mxu0 %v250
        %274 = vmatprep.subr.bf16.mxu0 0
        %275 = vmatpush1.bf16.msra.mxu0 %v251
        %276 = vmatprep.subr.bf16.mxu0 0
        %277 = vmatpush1.bf16.msra.mxu0 %v252
        %278 = vmatprep.subr.bf16.mxu0 0
        %279 = vmatpush1.bf16.msra.mxu0 0
        %280 = vmatprep.subr.bf16.mxu0 0
        %281 = vmatpush1.bf16.msra.mxu0 0
        %282 = vmatprep.subr.bf16.mxu0 0
        %283 = vmatpush1.bf16.msra.mxu0 0
        %284 = vmatprep.subr.bf16.mxu0 0
        %285 = vmatpush1.bf16.msra.mxu0 0
        %286 = vmatprep.subr.bf16.mxu0 0
        %287 = vmatpush1.bf16.msra.mxu0 0
        %288 = vmatprep.subr.bf16.mxu0 0
        %289 = vmatpush1.bf16.msra.mxu0 0
        %290 = vmatprep.subr.bf16.mxu0 0
        %291 = vmatpush1.bf16.msra.mxu0 0
        %292 = vmatprep.subr.bf16.mxu0 0
        %293 = vmatpush1.bf16.msra.mxu0 0
        %294 = vmatprep.subr.bf16.mxu0 0
        %295 = vmatpush1.bf16.msra.mxu0 0
        %296 = vmatprep.subr.bf16.mxu0 0
        %297 = vmatpush1.bf16.msra.mxu0 0
        %298 = vmatprep.subr.bf16.mxu0 0
        %299 = vmatpush1.bf16.msra.mxu0 0
        %300 = vmatprep.subr.bf16.mxu0 0
        %301 = vmatpush1.bf16.msra.mxu0 0
        %302 = vmatprep.mubr.bf16.mxu0 0
        %303 = vmatmul.mubr.bf16.gmra.mrb[0].mxu0 %v259
        %v304 = vpop.f32.mrb[0].mxu0
        %v305 = vadd.f32 0.0, %v304
        %v306 = vpop.f32.mrb[0].mxu0
        %v307 = vpop.f32.mrb[0].mxu0
        %v308 = vadd.f32 0.0, %v307
        %v309 = vpop.f32.mrb[0].mxu0
        %310 = vmatprep.mubr.bf16.mxu0 0
        %311 = vmatmul.mubr.bf16.gmra.mrb[0].mxu0 %v262
        %v312 = vpop.f32.mrb[0].mxu0
        %v313 = vadd.f32 0.0, %v312
        %v314 = vpop.f32.mrb[0].mxu0
        %v315 = vpop.f32.mrb[0].mxu0
        %v316 = vadd.f32 0.0, %v315
        %v317 = vpop.f32.mrb[0].mxu0
        %318 = vmatprep.mubr.bf16.mxu0 0
        %319 = vmatmul.mubr.bf16.gmra.mrb[0].mxu0 %v265
        %v320 = vpop.f32.mrb[0].mxu0
        %v321 = vadd.f32 0.0, %v320
        %v322 = vpop.f32.mrb[0].mxu0
        %v323 = vpop.f32.mrb[0].mxu0
        %v324 = vadd.f32 0.0, %v323
        %v325 = vpop.f32.mrb[0].mxu0
        %326 = vmatprep.mubr.bf16.mxu0 0
        %327 = vmatmul.mubr.bf16.gmra.mrb[0].mxu0 %v268
        %v328 = vpop.f32.mrb[0].mxu0
        %v329 = vadd.f32 0.0, %v328
        %v330 = vpop.f32.mrb[0].mxu0
        %v331 = vpop.f32.mrb[0].mxu0
        %v332 = vadd.f32 0.0, %v331
        %v333 = vpop.f32.mrb[0].mxu0
        %334 = vdwg.mxu0
        %vm335 = vcmp.gt.f32.partialorder %v305, 0.0
        %vm336 = vcmp.gt.f32.partialorder %v308, 0.0
        %vm337 = vcmp.gt.f32.partialorder %v313, 0.0
        %vm338 = vcmp.gt.f32.partialorder %v316, 0.0
        %vm339 = vcmp.gt.f32.partialorder %v321, 0.0
        %vm340 = vcmp.gt.f32.partialorder %v324, 0.0
        %vm341 = vcmp.gt.f32.partialorder %v329, 0.0
        %vm342 = vcmp.gt.f32.partialorder %v332, 0.0
        %v343 = vmul.f32 %v305, 0.01
        %v344 = vmul.f32 %v308, 0.01
        %v345 = vmul.f32 %v313, 0.01
        %v346 = vmul.f32 %v316, 0.01
        %v347 = vmul.f32 %v321, 0.01
        %v348 = vmul.f32 %v324, 0.01
        %v349 = vmul.f32 %v329, 0.01
        %v350 = vmul.f32 %v332, 0.01
        %v351 = vsel %vm335, %v305, %v343
        %v352 = vsel %vm336, %v308, %v344
        %v353 = vsel %vm337, %v313, %v345
        %v354 = vsel %vm338, %v316, %v346
        %v355 = vsel %vm339, %v321, %v347
        %v356 = vsel %vm340, %v324, %v348
        %v357 = vsel %vm341, %v329, %v349
        %v358 = vsel %vm342, %v332, %v350
        %v359 = vrot.slane %v357, 3
        %v360 = vrot.slane %v358, 3
        %v361 = vlaneseq
        %v362 = vshrl.u32 %v361, 7
        %vm363 = vcmp.lt.s32.totalorder %v362, 5
        %v364 = vsel %vm363, %v359, %v360
        %v365 = vsel %vm363, %v360, %v359
        %v366 = vadd.s32 %v362, 8
        %v367 = vand.u32 %v362, 3
        %v368 = vand.u32 %v366, 3
        %v369 = vshra.s32 %v362, 2
        %v370 = vshra.s32 %v366, 2
        %v371 = vadd.s32 %v367, 4294967295
        %v372 = vadd.s32 %v368, 4294967295
        %vm373 = vcmp.ge.s32.totalorder %v371, 0
        %vm374 = vcmp.ge.s32.totalorder %v372, 0
        %vm375 = vcmp.lt.s32.totalorder %v371, 4
        %vm376 = vcmp.lt.s32.totalorder %v372, 4
        %vm377 = vmand %vm373, %vm375
        %vm378 = vmand %vm374, %vm376
        %v379 = vadd.s32 %v369, 4294967295
        %v380 = vadd.s32 %v370, 4294967295
        %vm381 = vcmp.ge.s32.totalorder %v379, 0
        %vm382 = vcmp.ge.s32.totalorder %v380, 0
        %vm383 = vmand %vm377, %vm381
        %vm384 = vmand %vm378, %vm382
        %vm385 = vcmp.lt.s32.totalorder %v379, 4
        %vm386 = vcmp.lt.s32.totalorder %v380, 4
        %vm387 = vmand %vm383, %vm385
        %vm388 = vmand %vm384, %vm386
        %v389 = vsel %vm387, 1, 0
        %v390 = vsel %vm388, 1, 0
        %vm391 = vcmp.eq.s32.totalorder %v389, 1
        %vm392 = vcmp.eq.s32.totalorder %v390, 1
        %v393 = vsel %vm391, %v365, 0.0
        %v394 = vsel %vm392, %v364, 0.0
        %v395 = vrot.slane %v355, 7
        %v396 = vrot.slane %v356, 7
        %vm397 = vcmp.lt.s32.totalorder %v362, 1
        %v398 = vsel %vm397, %v395, %v396
        %v399 = vsel %vm397, %v396, %v395
        %vm400 = vcmp.ge.s32.totalorder %v369, 0
        %vm401 = vcmp.ge.s32.totalorder %v370, 0
        %vm402 = vmand %vm377, %vm400
        %vm403 = vmand %vm378, %vm401
        %vm404 = vcmp.lt.s32.totalorder %v369, 4
        %vm405 = vcmp.lt.s32.totalorder %v370, 4
        %vm406 = vmand %vm402, %vm404
        %vm407 = vmand %vm403, %vm405
        %v408 = vsel %vm406, 1, 0
        %v409 = vsel %vm407, 1, 0
        %vm410 = vcmp.eq.s32.totalorder %v408, 1
        %vm411 = vcmp.eq.s32.totalorder %v409, 1
        %v412 = vsel %vm410, %v399, 0.0
        %v413 = vsel %vm411, %v398, 0.0
        %v414 = vrot.slane %v357, 7
        %v415 = vrot.slane %v358, 7
        %v416 = vsel %vm397, %v414, %v415
        %v417 = vsel %vm397, %v415, %v414
        %v418 = vsel %vm410, %v417, 0.0
        %v419 = vsel %vm411, %v416, 0.0
        %v420 = vrot.slane %v355, 3
        %v421 = vrot.slane %v356, 3
        %v422 = vsel %vm363, %v420, %v421
        %v423 = vsel %vm363, %v421, %v420
        %v424 = vadd.s32 %v369, 1
        %v425 = vadd.s32 %v370, 1
        %vm426 = vcmp.ge.s32.totalorder %v424, 0
        %vm427 = vcmp.ge.s32.totalorder %v425, 0
        %vm428 = vmand %vm377, %vm426
        %vm429 = vmand %vm378, %vm427
        %vm430 = vcmp.lt.s32.totalorder %v424, 4
        %vm431 = vcmp.lt.s32.totalorder %v425, 4
        %vm432 = vmand %vm428, %vm430
        %vm433 = vmand %vm429, %vm431
        %v434 = vsel %vm432, 1, 0
        %v435 = vsel %vm433, 1, 0
        %vm436 = vcmp.eq.s32.totalorder %v434, 1
        %vm437 = vcmp.eq.s32.totalorder %v435, 1
        %v438 = vsel %vm436, %v422, 0.0
        %v439 = vsel %vm437, %v423, 0.0
        %v440 = vrot.slane %v353, 4
        %v441 = vrot.slane %v354, 4
        %vm442 = vcmp.lt.s32.totalorder %v362, 4
        %v443 = vsel %vm442, %v440, %v441
        %v444 = vsel %vm442, %v441, %v440
        %vm445 = vcmp.ge.s32.totalorder %v367, 0
        %vm446 = vcmp.ge.s32.totalorder %v368, 0
        %vm447 = vcmp.lt.s32.totalorder %v367, 4
        %vm448 = vcmp.lt.s32.totalorder %v368, 4
        %vm449 = vmand %vm445, %vm447
        %vm450 = vmand %vm446, %vm448
        %vm451 = vmand %vm449, %vm381
        %vm452 = vmand %vm450, %vm382
        %vm453 = vmand %vm451, %vm385
        %vm454 = vmand %vm452, %vm386
        %v455 = vsel %vm453, 1, 0
        %v456 = vsel %vm454, 1, 0
        %vm457 = vcmp.eq.s32.totalorder %v455, 1
        %vm458 = vcmp.eq.s32.totalorder %v456, 1
        %v459 = vsel %vm457, %v444, 0.0
        %v460 = vsel %vm458, %v443, 0.0
        %v461 = vrot.slane %v351, 4
        %v462 = vrot.slane %v352, 4
        %v463 = vsel %vm442, %v461, %v462
        %v464 = vsel %vm442, %v462, %v461
        %vm465 = vmand %vm449, %vm426
        %vm466 = vmand %vm450, %vm427
        %vm467 = vmand %vm465, %vm430
        %vm468 = vmand %vm466, %vm431
        %v469 = vsel %vm467, 1, 0
        %v470 = vsel %vm468, 1, 0
        %vm471 = vcmp.eq.s32.totalorder %v469, 1
        %vm472 = vcmp.eq.s32.totalorder %v470, 1
        %v473 = vsel %vm471, %v463, 0.0
        %v474 = vsel %vm472, %v464, 0.0
        %v475 = vrot.slane %v357, 4
        %v476 = vrot.slane %v358, 4
        %v477 = vsel %vm442, %v475, %v476
        %v478 = vsel %vm442, %v476, %v475
        %v479 = vsel %vm457, %v478, 0.0
        %v480 = vsel %vm458, %v477, 0.0
        %v481 = vrot.slane %v355, 4
        %v482 = vrot.slane %v356, 4
        %v483 = vsel %vm442, %v481, %v482
        %v484 = vsel %vm442, %v482, %v481
        %v485 = vsel %vm471, %v483, 0.0
        %v486 = vsel %vm472, %v484, 0.0
        %v487 = vrot.slane %v353, 5
        %v488 = vrot.slane %v354, 5
        %vm489 = vcmp.lt.s32.totalorder %v362, 3
        %v490 = vsel %vm489, %v487, %v488
        %v491 = vsel %vm489, %v488, %v487
        %v492 = vadd.s32 %v367, 1
        %v493 = vadd.s32 %v368, 1
        %vm494 = vcmp.ge.s32.totalorder %v492, 0
        %vm495 = vcmp.ge.s32.totalorder %v493, 0
        %vm496 = vcmp.lt.s32.totalorder %v492, 4
        %vm497 = vcmp.lt.s32.totalorder %v493, 4
        %vm498 = vmand %vm494, %vm496
        %vm499 = vmand %vm495, %vm497
        %vm500 = vmand %vm498, %vm381
        %vm501 = vmand %vm499, %vm382
        %vm502 = vmand %vm500, %vm385
        %vm503 = vmand %vm501, %vm386
        %v504 = vsel %vm502, 1, 0
        %v505 = vsel %vm503, 1, 0
        %vm506 = vcmp.eq.s32.totalorder %v504, 1
        %vm507 = vcmp.eq.s32.totalorder %v505, 1
        %v508 = vsel %vm506, %v491, 0.0
        %v509 = vsel %vm507, %v490, 0.0
        %v510 = vrot.slane %v351, 1
        %v511 = vrot.slane %v352, 1
        %vm512 = vcmp.lt.s32.totalorder %v362, 7
        %v513 = vsel %vm512, %v510, %v511
        %v514 = vsel %vm512, %v511, %v510
        %vm515 = vmand %vm498, %vm400
        %vm516 = vmand %vm499, %vm401
        %vm517 = vmand %vm515, %vm404
        %vm518 = vmand %vm516, %vm405
        %v519 = vsel %vm517, 1, 0
        %v520 = vsel %vm518, 1, 0
        %vm521 = vcmp.eq.s32.totalorder %v519, 1
        %vm522 = vcmp.eq.s32.totalorder %v520, 1
        %v523 = vsel %vm521, %v513, 0.0
        %v524 = vsel %vm522, %v514, 0.0
        %v525 = vrot.slane %v353, 1
        %v526 = vrot.slane %v354, 1
        %v527 = vsel %vm512, %v525, %v526
        %v528 = vsel %vm512, %v526, %v525
        %v529 = vsel %vm521, %v527, 0.0
        %v530 = vsel %vm522, %v528, 0.0
        %v531 = vrot.slane %v351, 5
        %v532 = vrot.slane %v352, 5
        %v533 = vsel %vm489, %v531, %v532
        %v534 = vsel %vm489, %v532, %v531
        %vm535 = vmand %vm498, %vm426
        %vm536 = vmand %vm499, %vm427
        %vm537 = vmand %vm535, %vm430
        %vm538 = vmand %vm536, %vm431
        %v539 = vsel %vm537, 1, 0
        %v540 = vsel %vm538, 1, 0
        %vm541 = vcmp.eq.s32.totalorder %v539, 1
        %vm542 = vcmp.eq.s32.totalorder %v540, 1
        %v543 = vsel %vm541, %v533, 0.0
        %v544 = vsel %vm542, %v534, 0.0
        %547 = vrot.lane.b32.xlu0 %v412, 32
        %v548 = vpop.permute.xlu0 %547
        %549 = vrot.lane.b32.xlu0 %v413, 32
        %v550 = vpop.permute.xlu0 %549
        %555 = vrot.lane.b32.xlu0 %v418, 64
        %v556 = vpop.permute.xlu0 %555
        %557 = vrot.lane.b32.xlu0 %v419, 64
        %v558 = vpop.permute.xlu0 %557
        %563 = vrot.lane.b32.xlu0 %v438, 96
        %v564 = vpop.permute.xlu0 %563
        %565 = vrot.lane.b32.xlu0 %v439, 96
        %v566 = vpop.permute.xlu0 %565
        %571 = vrot.lane.b32.xlu0 %v351, 32
        %v572 = vpop.permute.xlu0 %571
        %573 = vrot.lane.b32.xlu0 %v352, 32
        %v574 = vpop.permute.xlu0 %573
        %579 = vrot.lane.b32.xlu0 %v353, 64
        %v580 = vpop.permute.xlu0 %579
        %581 = vrot.lane.b32.xlu0 %v354, 64
        %v582 = vpop.permute.xlu0 %581
        %587 = vrot.lane.b32.xlu0 %v473, 96
        %v588 = vpop.permute.xlu0 %587
        %589 = vrot.lane.b32.xlu0 %v474, 96
        %v590 = vpop.permute.xlu0 %589
        %595 = vrot.lane.b32.xlu0 %v355, 32
        %v596 = vpop.permute.xlu0 %595
        %597 = vrot.lane.b32.xlu0 %v356, 32
        %v598 = vpop.permute.xlu0 %597
        %603 = vrot.lane.b32.xlu0 %v357, 64
        %v604 = vpop.permute.xlu0 %603
        %605 = vrot.lane.b32.xlu0 %v358, 64
        %v606 = vpop.permute.xlu0 %605
        %611 = vrot.lane.b32.xlu0 %v485, 96
        %v612 = vpop.permute.xlu0 %611
        %613 = vrot.lane.b32.xlu0 %v486, 96
        %v614 = vpop.permute.xlu0 %613
        %619 = vrot.lane.b32.xlu0 %v523, 32
        %v620 = vpop.permute.xlu0 %619
        %621 = vrot.lane.b32.xlu0 %v524, 32
        %v622 = vpop.permute.xlu0 %621
        %627 = vrot.lane.b32.xlu0 %v529, 64
        %v628 = vpop.permute.xlu0 %627
        %629 = vrot.lane.b32.xlu0 %v530, 64
        %v630 = vpop.permute.xlu0 %629
        %635 = vrot.lane.b32.xlu0 %v543, 96
        %v636 = vpop.permute.xlu0 %635
        %637 = vrot.lane.b32.xlu0 %v544, 96
        %v638 = vpop.permute.xlu0 %637
        %vm641 = vcmask 261120
        %v642 = vsel %vm641, %v393, %v548
        %v643 = vsel %vm641, %v394, %v550
        %v644 = vsel %vm257, %v642, %v556
        %v645 = vsel %vm257, %v643, %v558
        %vm646 = vcmask 785408
        %v647 = vsel %vm646, %v644, %v564
        %v648 = vsel %vm646, %v645, %v566
        %v649 = vsel %vm641, %v459, %v572
        %v650 = vsel %vm641, %v460, %v574
        %v651 = vsel %vm257, %v649, %v580
        %v652 = vsel %vm257, %v650, %v582
        %v653 = vsel %vm646, %v651, %v588
        %v654 = vsel %vm646, %v652, %v590
        %v655 = vsel %vm641, %v479, %v596
        %v656 = vsel %vm641, %v480, %v598
        %v657 = vsel %vm257, %v655, %v604
        %v658 = vsel %vm257, %v656, %v606
        %v659 = vsel %vm646, %v657, %v612
        %v660 = vsel %vm646, %v658, %v614
        %v661 = vsel %vm641, %v508, %v620
        %v662 = vsel %vm641, %v509, %v622
        %v663 = vsel %vm257, %v661, %v628
        %v664 = vsel %vm257, %v662, %v630
        %v665 = vsel %vm646, %v663, %v636
        %v666 = vsel %vm646, %v664, %v638
        %v667 = vpack.c.bf16 %v648, %v647
        %v668 = vpack.c.bf16 %v654, %v653
        %v669 = vpack.c.bf16 %v660, %v659
        %v670 = vpack.c.bf16 %v666, %v665
        %v671 = vld [vmem:[%s2] sm:$0xf]
        %v672 = vld [vmem:[%s2 + $0x4] sm:$0xf]
        %v673 = vld [vmem:[%s2 + $0x8] sm:$0xf]
        %v674 = vld [vmem:[%s2 + $0xc] sm:$0xf]
        %v675 = vld [vmem:[%s2 + $0x10] sm:$0xf]
        %v676 = vld [vmem:[%s2 + $0x14] sm:$0xf]
        %v677 = vld [vmem:[%s2 + $0x18] sm:$0xf]
        %v678 = vld [vmem:[%s2 + $0x1c] sm:$0xf]
        %v679 = vld [vmem:[%s2 + $0x20] sm:$0xf]
        %v680 = vld [vmem:[%s2 + $0x24] sm:$0xf]
        %v681 = vld [vmem:[%s2 + $0x28] sm:$0xf]
        %v682 = vld [vmem:[%s2 + $0x2c] sm:$0xf]
        %v683 = vld [vmem:[%s2 + $0x30] sm:$0xf]
        %v684 = vld [vmem:[%s2 + $0x34] sm:$0xf]
        %v685 = vld [vmem:[%s2 + $0x38] sm:$0xf]
        %v686 = vld [vmem:[%s2 + $0x3c] sm:$0xf]
        %v687 = vld [vmem:[%s2 + $0x40] sm:$0xf]
        %v688 = vld [vmem:[%s2 + $0x44] sm:$0xf]
        %v689 = vld [vmem:[%s2 + $0x48] sm:$0xf]
        %v690 = vld [vmem:[%s2 + $0x4c] sm:$0xf]
        %v691 = vld [vmem:[%s2 + $0x50] sm:$0xf]
        %v692 = vld [vmem:[%s2 + $0x54] sm:$0xf]
        %v693 = vld [vmem:[%s2 + $0x58] sm:$0xf]
        %v694 = vld [vmem:[%s2 + $0x5c] sm:$0xf]
        %v695 = vld [vmem:[%s2 + $0x60] sm:$0xf]
        %v696 = vld [vmem:[%s2 + $0x64] sm:$0xf]
        %v697 = vld [vmem:[%s2 + $0x68] sm:$0xf]
        %v698 = vld [vmem:[%s2 + $0x6c] sm:$0xf]
        %v699 = vld [vmem:[%s2 + $0x70] sm:$0xf]
        %v700 = vld [vmem:[%s2 + $0x74] sm:$0xf]
        %v701 = vld [vmem:[%s2 + $0x78] sm:$0xf]
        %v702 = vld [vmem:[%s2 + $0x7c] sm:$0xf]
        %v703 = vld [vmem:[%s2 + $0x80] sm:$0xf]
        %v704 = vld [vmem:[%s2 + $0x84] sm:$0xf]
        %v705 = vld [vmem:[%s2 + $0x88] sm:$0xf]
        %v706 = vld [vmem:[%s2 + $0x8c] sm:$0xf]
        %v707 = vld [vmem:[%s2 + $0x90] sm:$0xf]
        %v708 = vld [vmem:[%s2 + $0x94] sm:$0xf]
        %v709 = vld [vmem:[%s2 + $0x98] sm:$0xf]
        %v710 = vld [vmem:[%s2 + $0x9c] sm:$0xf]
        %v711 = vld [vmem:[%s2 + $0xa0] sm:$0xf]
        %v712 = vld [vmem:[%s2 + $0xa4] sm:$0xf]
        %v713 = vld [vmem:[%s2 + $0xa8] sm:$0xf]
        %v714 = vld [vmem:[%s2 + $0xac] sm:$0xf]
        %v715 = vld [vmem:[%s2 + $0xb0] sm:$0xf]
        %v716 = vld [vmem:[%s2 + $0xb4] sm:$0xf]
        %v717 = vld [vmem:[%s2 + $0xb8] sm:$0xf]
        %v718 = vld [vmem:[%s2 + $0xbc] sm:$0xf]
        %v719 = vld [vmem:[%s2 + $0xc0] sm:$0xf]
        %v720 = vld [vmem:[%s2 + $0xc4] sm:$0xf]
        %v721 = vld [vmem:[%s2 + $0xc8] sm:$0xf]
        %v722 = vld [vmem:[%s2 + $0xcc] sm:$0xf]
        %v723 = vld [vmem:[%s2 + $0xd0] sm:$0xf]
        %v724 = vld [vmem:[%s2 + $0xd4] sm:$0xf]
        %v725 = vld [vmem:[%s2 + $0xd8] sm:$0xf]
        %v726 = vld [vmem:[%s2 + $0xdc] sm:$0xf]
        %v727 = vld [vmem:[%s2 + $0xe0] sm:$0xf]
        %v728 = vld [vmem:[%s2 + $0xe4] sm:$0xf]
        %v729 = vld [vmem:[%s2 + $0xe8] sm:$0xf]
        %v730 = vld [vmem:[%s2 + $0xec] sm:$0xf]
        %v731 = vld [vmem:[%s2 + $0xf0] sm:$0xf]
        %v732 = vld [vmem:[%s2 + $0xf4] sm:$0xf]
        %v733 = vld [vmem:[%s2 + $0xf8] sm:$0xf]
        %v734 = vld [vmem:[%s2 + $0xfc] sm:$0xf]
        %v799 = vunpack.c.l.b16 %v671
        %v800 = vunpack.c.l.b16 %v672
        %v801 = vunpack.c.l.b16 %v673
        %v802 = vunpack.c.l.b16 %v674
        %v803 = vunpack.c.l.b16 %v675
        %v804 = vunpack.c.l.b16 %v676
        %v805 = vunpack.c.l.b16 %v677
        %v806 = vunpack.c.l.b16 %v678
        %v807 = vunpack.c.l.b16 %v679
        %v808 = vunpack.c.l.b16 %v680
        %v809 = vunpack.c.l.b16 %v681
        %v810 = vunpack.c.l.b16 %v682
        %v811 = vunpack.c.l.b16 %v683
        %v812 = vunpack.c.l.b16 %v684
        %v813 = vunpack.c.l.b16 %v685
        %v814 = vunpack.c.l.b16 %v686
        %v815 = vunpack.c.l.b16 %v687
        %v816 = vunpack.c.l.b16 %v688
        %v817 = vunpack.c.l.b16 %v689
        %v818 = vunpack.c.l.b16 %v690
        %v819 = vunpack.c.l.b16 %v691
        %v820 = vunpack.c.l.b16 %v692
        %v821 = vunpack.c.l.b16 %v693
        %v822 = vunpack.c.l.b16 %v694
        %v823 = vunpack.c.l.b16 %v695
        %v824 = vunpack.c.l.b16 %v696
        %v825 = vunpack.c.l.b16 %v697
        %v826 = vunpack.c.l.b16 %v698
        %v827 = vunpack.c.l.b16 %v699
        %v828 = vunpack.c.l.b16 %v700
        %v829 = vunpack.c.l.b16 %v701
        %v830 = vunpack.c.l.b16 %v702
        %v831 = vunpack.c.l.b16 %v703
        %v832 = vunpack.c.l.b16 %v704
        %v833 = vunpack.c.l.b16 %v705
        %v834 = vunpack.c.l.b16 %v706
        %v835 = vunpack.c.l.b16 %v707
        %v836 = vunpack.c.l.b16 %v708
        %v837 = vunpack.c.l.b16 %v709
        %v838 = vunpack.c.l.b16 %v710
        %v839 = vunpack.c.l.b16 %v711
        %v840 = vunpack.c.l.b16 %v712
        %v841 = vunpack.c.l.b16 %v713
        %v842 = vunpack.c.l.b16 %v714
        %v843 = vunpack.c.l.b16 %v715
        %v844 = vunpack.c.l.b16 %v716
        %v845 = vunpack.c.l.b16 %v717
        %v846 = vunpack.c.l.b16 %v718
        %v847 = vunpack.c.l.b16 %v719
        %v848 = vunpack.c.l.b16 %v720
        %v849 = vunpack.c.l.b16 %v721
        %v850 = vunpack.c.l.b16 %v722
        %v851 = vunpack.c.l.b16 %v723
        %v852 = vunpack.c.l.b16 %v724
        %v853 = vunpack.c.l.b16 %v725
        %v854 = vunpack.c.l.b16 %v726
        %v855 = vunpack.c.l.b16 %v727
        %v856 = vunpack.c.l.b16 %v728
        %v857 = vunpack.c.l.b16 %v729
        %v858 = vunpack.c.l.b16 %v730
        %v859 = vunpack.c.l.b16 %v731
        %v860 = vunpack.c.l.b16 %v732
        %v861 = vunpack.c.l.b16 %v733
        %v862 = vunpack.c.l.b16 %v734
        %v863 = vpack.c.b16 %v800, %v799
        %v864 = vpack.c.b16 %v802, %v801
        %v865 = vpack.c.b16 %v804, %v803
        %v866 = vpack.c.b16 %v806, %v805
        %v867 = vpack.c.b16 %v808, %v807
        %v868 = vpack.c.b16 %v810, %v809
        %v869 = vpack.c.b16 %v812, %v811
        %v870 = vpack.c.b16 %v814, %v813
        %v871 = vpack.c.b16 %v816, %v815
        %v872 = vpack.c.b16 %v818, %v817
        %v873 = vpack.c.b16 %v820, %v819
        %v874 = vpack.c.b16 %v822, %v821
        %v875 = vpack.c.b16 %v824, %v823
        %v876 = vpack.c.b16 %v826, %v825
        %v877 = vpack.c.b16 %v828, %v827
        %v878 = vpack.c.b16 %v830, %v829
        %v879 = vpack.c.b16 %v832, %v831
        %v880 = vpack.c.b16 %v834, %v833
        %v881 = vpack.c.b16 %v836, %v835
        %v882 = vpack.c.b16 %v838, %v837
        %v883 = vpack.c.b16 %v840, %v839
        %v884 = vpack.c.b16 %v842, %v841
        %v885 = vpack.c.b16 %v844, %v843
        %v886 = vpack.c.b16 %v846, %v845
        %v887 = vpack.c.b16 %v848, %v847
        %v888 = vpack.c.b16 %v850, %v849
        %v889 = vpack.c.b16 %v852, %v851
        %v890 = vpack.c.b16 %v854, %v853
        %v891 = vpack.c.b16 %v856, %v855
        %v892 = vpack.c.b16 %v858, %v857
        %v893 = vpack.c.b16 %v860, %v859
        %v894 = vpack.c.b16 %v862, %v861
        %927 = vmatprep.subr.bf16.mxu0 0
        %928 = vmatpush1.bf16.msra.mxu0 %v863
        %929 = vmatprep.subr.bf16.mxu0 0
        %930 = vmatpush1.bf16.msra.mxu0 %v864
        %931 = vmatprep.subr.bf16.mxu0 0
        %932 = vmatpush1.bf16.msra.mxu0 %v865
        %933 = vmatprep.subr.bf16.mxu0 0
        %934 = vmatpush1.bf16.msra.mxu0 %v866
        %935 = vmatprep.subr.bf16.mxu0 0
        %936 = vmatpush1.bf16.msra.mxu0 %v867
        %937 = vmatprep.subr.bf16.mxu0 0
        %938 = vmatpush1.bf16.msra.mxu0 %v868
        %939 = vmatprep.subr.bf16.mxu0 0
        %940 = vmatpush1.bf16.msra.mxu0 %v869
        %941 = vmatprep.subr.bf16.mxu0 0
        %942 = vmatpush1.bf16.msra.mxu0 %v870
        %943 = vmatprep.subr.bf16.mxu0 0
        %944 = vmatpush1.bf16.msra.mxu0 %v871
        %945 = vmatprep.subr.bf16.mxu0 0
        %946 = vmatpush1.bf16.msra.mxu0 %v872
        %947 = vmatprep.subr.bf16.mxu0 0
        %948 = vmatpush1.bf16.msra.mxu0 %v873
        %949 = vmatprep.subr.bf16.mxu0 0
        %950 = vmatpush1.bf16.msra.mxu0 %v874
        %951 = vmatprep.subr.bf16.mxu0 0
        %952 = vmatpush1.bf16.msra.mxu0 %v875
        %953 = vmatprep.subr.bf16.mxu0 0
        %954 = vmatpush1.bf16.msra.mxu0 %v876
        %955 = vmatprep.subr.bf16.mxu0 0
        %956 = vmatpush1.bf16.msra.mxu0 %v877
        %957 = vmatprep.subr.bf16.mxu0 0
        %958 = vmatpush1.bf16.msra.mxu0 %v878
        %959 = vmatprep.mubr.bf16.mxu0 %v668
        %960 = vmatmul.mubr.bf16.gmra.mrb[0].mxu0 %v667
        %v961 = vpop.f32.mrb[0].mxu0
        %v962 = vadd.f32 0.0, %v961
        %v963 = vpop.f32.mrb[0].mxu0
        %v964 = vpop.f32.mrb[0].mxu0
        %v965 = vadd.f32 0.0, %v964
        %v966 = vpop.f32.mrb[0].mxu0
        %967 = vdwg.mxu0
        %968 = vmatprep.subr.bf16.mxu0 0
        %969 = vmatpush1.bf16.msra.mxu0 %v879
        %970 = vmatprep.subr.bf16.mxu0 0
        %971 = vmatpush1.bf16.msra.mxu0 %v880
        %972 = vmatprep.subr.bf16.mxu0 0
        %973 = vmatpush1.bf16.msra.mxu0 %v881
        %974 = vmatprep.subr.bf16.mxu0 0
        %975 = vmatpush1.bf16.msra.mxu0 %v882
        %976 = vmatprep.subr.bf16.mxu0 0
        %977 = vmatpush1.bf16.msra.mxu0 %v883
        %978 = vmatprep.subr.bf16.mxu0 0
        %979 = vmatpush1.bf16.msra.mxu0 %v884
        %980 = vmatprep.subr.bf16.mxu0 0
        %981 = vmatpush1.bf16.msra.mxu0 %v885
        %982 = vmatprep.subr.bf16.mxu0 0
        %983 = vmatpush1.bf16.msra.mxu0 %v886
        %984 = vmatprep.subr.bf16.mxu0 0
        %985 = vmatpush1.bf16.msra.mxu0 %v887
        %986 = vmatprep.subr.bf16.mxu0 0
        %987 = vmatpush1.bf16.msra.mxu0 %v888
        %988 = vmatprep.subr.bf16.mxu0 0
        %989 = vmatpush1.bf16.msra.mxu0 %v889
        %990 = vmatprep.subr.bf16.mxu0 0
        %991 = vmatpush1.bf16.msra.mxu0 %v890
        %992 = vmatprep.subr.bf16.mxu0 0
        %993 = vmatpush1.bf16.msra.mxu0 %v891
        %994 = vmatprep.subr.bf16.mxu0 0
        %995 = vmatpush1.bf16.msra.mxu0 %v892
        %996 = vmatprep.subr.bf16.mxu0 0
        %997 = vmatpush1.bf16.msra.mxu0 %v893
        %998 = vmatprep.subr.bf16.mxu0 0
        %999 = vmatpush1.bf16.msra.mxu0 %v894
        %1000 = vmatprep.mubr.bf16.mxu0 %v670
        %1001 = vmatmul.mubr.bf16.gmra.mrb[0].mxu0 %v669
        %v1002 = vpop.f32.mrb[0].mxu0
        %v1003 = vadd.f32 %v962, %v1002
        %v1004 = vpop.f32.mrb[0].mxu0
        %v1005 = vpop.f32.mrb[0].mxu0
        %v1006 = vadd.f32 %v965, %v1005
        %v1007 = vpop.f32.mrb[0].mxu0
        %1008 = vdwg.mxu0
        %vm1009 = vcmp.gt.f32.partialorder %v1003, 0.0
        %vm1010 = vcmp.gt.f32.partialorder %v1006, 0.0
        %v1011 = vmul.f32 %v1003, 0.01
        %v1012 = vmul.f32 %v1006, 0.01
        %v1013 = vsel %vm1009, %v1003, %v1011
        %v1014 = vsel %vm1010, %v1006, %v1012
        %v1015 = vrot.slane %v1013, 3
        %v1016 = vrot.slane %v1014, 3
        %v1017 = vsel %vm363, %v1015, %v1016
        %v1018 = vsel %vm363, %v1016, %v1015
        %v1019 = vsel %vm391, %v1018, 0.0
        %v1020 = vsel %vm392, %v1017, 0.0
        %v1021 = vrot.slane %v1013, 7
        %v1022 = vrot.slane %v1014, 7
        %v1023 = vsel %vm397, %v1021, %v1022
        %v1024 = vsel %vm397, %v1022, %v1021
        %v1025 = vsel %vm410, %v1024, 0.0
        %v1026 = vsel %vm411, %v1023, 0.0
        %v1027 = vsel %vm436, %v1017, 0.0
        %v1028 = vsel %vm437, %v1018, 0.0
        %v1029 = vrot.slane %v1013, 4
        %v1030 = vrot.slane %v1014, 4
        %v1031 = vsel %vm442, %v1029, %v1030
        %v1032 = vsel %vm442, %v1030, %v1029
        %v1033 = vsel %vm457, %v1032, 0.0
        %v1034 = vsel %vm458, %v1031, 0.0
        %v1035 = vsel %vm471, %v1031, 0.0
        %v1036 = vsel %vm472, %v1032, 0.0
        %v1037 = vrot.slane %v1013, 5
        %v1038 = vrot.slane %v1014, 5
        %v1039 = vsel %vm489, %v1037, %v1038
        %v1040 = vsel %vm489, %v1038, %v1037
        %v1041 = vsel %vm506, %v1040, 0.0
        %v1042 = vsel %vm507, %v1039, 0.0
        %v1043 = vrot.slane %v1013, 1
        %v1044 = vrot.slane %v1014, 1
        %v1045 = vsel %vm512, %v1043, %v1044
        %v1046 = vsel %vm512, %v1044, %v1043
        %v1047 = vsel %vm521, %v1045, 0.0
        %v1048 = vsel %vm522, %v1046, 0.0
        %v1049 = vsel %vm541, %v1039, 0.0
        %v1050 = vsel %vm542, %v1040, 0.0
        %1053 = vrot.lane.b32.xlu0 %v1025, 64
        %v1054 = vpop.permute.xlu0 %1053
        %1055 = vrot.lane.b32.xlu0 %v1026, 64
        %v1056 = vpop.permute.xlu0 %1055
        %1061 = vrot.lane.b32.xlu0 %v1033, 64
        %v1062 = vpop.permute.xlu0 %1061
        %1063 = vrot.lane.b32.xlu0 %v1034, 64
        %v1064 = vpop.permute.xlu0 %1063
        %1069 = vrot.lane.b32.xlu0 %v1035, 64
        %v1070 = vpop.permute.xlu0 %1069
        %1071 = vrot.lane.b32.xlu0 %v1036, 64
        %v1072 = vpop.permute.xlu0 %1071
        %1077 = vrot.lane.b32.xlu0 %v1047, 64
        %v1078 = vpop.permute.xlu0 %1077
        %1079 = vrot.lane.b32.xlu0 %v1048, 64
        %v1080 = vpop.permute.xlu0 %1079
        %v1083 = vsel %vm257, %v1019, %v1054
        %v1084 = vsel %vm257, %v1020, %v1056
        %v1085 = vsel %vm257, %v1027, %v1062
        %v1086 = vsel %vm257, %v1028, %v1064
        %v1087 = vsel %vm257, %v1013, %v1070
        %v1088 = vsel %vm257, %v1014, %v1072
        %v1089 = vsel %vm257, %v1041, %v1078
        %v1090 = vsel %vm257, %v1042, %v1080
        %v1091 = vpack.c.bf16 %v1084, %v1083
        %v1092 = vpack.c.bf16 %v1086, %v1085
        %v1093 = vpack.c.bf16 %v1088, %v1087
        %v1094 = vpack.c.bf16 %v1090, %v1089
        %v1095 = vpack.c.bf16 %v1050, %v1049
        %v1096 = vld [vmem:[%s3] sm:$0xf]
        %v1097 = vld [vmem:[%s3 + $0x4] sm:$0xf]
        %v1098 = vld [vmem:[%s3 + $0x8] sm:$0xf]
        %v1099 = vld [vmem:[%s3 + $0xc] sm:$0xf]
        %v1100 = vld [vmem:[%s3 + $0x10] sm:$0xf]
        %v1101 = vld [vmem:[%s3 + $0x14] sm:$0xf]
        %v1102 = vld [vmem:[%s3 + $0x18] sm:$0xf]
        %v1103 = vld [vmem:[%s3 + $0x1c] sm:$0xf]
        %v1104 = vld [vmem:[%s3 + $0x20] sm:$0xf]
        %v1105 = vld [vmem:[%s3 + $0x24] sm:$0xf]
        %v1106 = vld [vmem:[%s3 + $0x28] sm:$0xf]
        %v1107 = vld [vmem:[%s3 + $0x2c] sm:$0xf]
        %v1108 = vld [vmem:[%s3 + $0x30] sm:$0xf]
        %v1109 = vld [vmem:[%s3 + $0x34] sm:$0xf]
        %v1110 = vld [vmem:[%s3 + $0x38] sm:$0xf]
        %v1111 = vld [vmem:[%s3 + $0x3c] sm:$0xf]
        %v1112 = vld [vmem:[%s3 + $0x40] sm:$0xf]
        %v1113 = vld [vmem:[%s3 + $0x44] sm:$0xf]
        %v1114 = vld [vmem:[%s3 + $0x48] sm:$0xf]
        %v1115 = vld [vmem:[%s3 + $0x4c] sm:$0xf]
        %v1116 = vld [vmem:[%s3 + $0x50] sm:$0xf]
        %v1117 = vld [vmem:[%s3 + $0x54] sm:$0xf]
        %v1118 = vld [vmem:[%s3 + $0x58] sm:$0xf]
        %v1119 = vld [vmem:[%s3 + $0x5c] sm:$0xf]
        %v1120 = vld [vmem:[%s3 + $0x60] sm:$0xf]
        %v1121 = vld [vmem:[%s3 + $0x64] sm:$0xf]
        %v1122 = vld [vmem:[%s3 + $0x68] sm:$0xf]
        %v1123 = vld [vmem:[%s3 + $0x6c] sm:$0xf]
        %v1124 = vld [vmem:[%s3 + $0x70] sm:$0xf]
        %v1125 = vld [vmem:[%s3 + $0x74] sm:$0xf]
        %v1126 = vld [vmem:[%s3 + $0x78] sm:$0xf]
        %v1127 = vld [vmem:[%s3 + $0x7c] sm:$0xf]
        %v1128 = vld [vmem:[%s3 + $0x80] sm:$0xf]
        %v1129 = vld [vmem:[%s3 + $0x84] sm:$0xf]
        %v1130 = vld [vmem:[%s3 + $0x88] sm:$0xf]
        %v1131 = vld [vmem:[%s3 + $0x8c] sm:$0xf]
        %v1132 = vld [vmem:[%s3 + $0x90] sm:$0xf]
        %v1133 = vld [vmem:[%s3 + $0x94] sm:$0xf]
        %v1134 = vld [vmem:[%s3 + $0x98] sm:$0xf]
        %v1135 = vld [vmem:[%s3 + $0x9c] sm:$0xf]
        %v1136 = vld [vmem:[%s3 + $0xa0] sm:$0xf]
        %v1137 = vld [vmem:[%s3 + $0xa4] sm:$0xf]
        %v1138 = vld [vmem:[%s3 + $0xa8] sm:$0xf]
        %v1139 = vld [vmem:[%s3 + $0xac] sm:$0xf]
        %v1140 = vld [vmem:[%s3 + $0xb0] sm:$0xf]
        %v1141 = vld [vmem:[%s3 + $0xb4] sm:$0xf]
        %v1142 = vld [vmem:[%s3 + $0xb8] sm:$0xf]
        %v1143 = vld [vmem:[%s3 + $0xbc] sm:$0xf]
        %v1144 = vld [vmem:[%s3 + $0xc0] sm:$0xf]
        %v1145 = vld [vmem:[%s3 + $0xc4] sm:$0xf]
        %v1146 = vld [vmem:[%s3 + $0xc8] sm:$0xf]
        %v1147 = vld [vmem:[%s3 + $0xcc] sm:$0xf]
        %v1148 = vld [vmem:[%s3 + $0xd0] sm:$0xf]
        %v1149 = vld [vmem:[%s3 + $0xd4] sm:$0xf]
        %v1150 = vld [vmem:[%s3 + $0xd8] sm:$0xf]
        %v1151 = vld [vmem:[%s3 + $0xdc] sm:$0xf]
        %v1152 = vld [vmem:[%s3 + $0xe0] sm:$0xf]
        %v1153 = vld [vmem:[%s3 + $0xe4] sm:$0xf]
        %v1154 = vld [vmem:[%s3 + $0xe8] sm:$0xf]
        %v1155 = vld [vmem:[%s3 + $0xec] sm:$0xf]
        %v1156 = vld [vmem:[%s3 + $0xf0] sm:$0xf]
        %v1157 = vld [vmem:[%s3 + $0xf4] sm:$0xf]
        %v1158 = vld [vmem:[%s3 + $0xf8] sm:$0xf]
        %v1159 = vld [vmem:[%s3 + $0xfc] sm:$0xf]
        %v1160 = vld [vmem:[%s3 + $0x100] sm:$0xf]
        %v1161 = vld [vmem:[%s3 + $0x104] sm:$0xf]
        %v1162 = vld [vmem:[%s3 + $0x108] sm:$0xf]
        %v1163 = vld [vmem:[%s3 + $0x10c] sm:$0xf]
        %v1164 = vld [vmem:[%s3 + $0x110] sm:$0xf]
        %v1165 = vld [vmem:[%s3 + $0x114] sm:$0xf]
        %v1166 = vld [vmem:[%s3 + $0x118] sm:$0xf]
        %v1167 = vld [vmem:[%s3 + $0x11c] sm:$0xf]
        %v1240 = vunpack.c.l.b16 %v1096
        %v1241 = vunpack.c.l.b16 %v1097
        %v1242 = vunpack.c.l.b16 %v1098
        %v1243 = vunpack.c.l.b16 %v1099
        %v1244 = vunpack.c.l.b16 %v1100
        %v1245 = vunpack.c.l.b16 %v1101
        %v1246 = vunpack.c.l.b16 %v1102
        %v1247 = vunpack.c.l.b16 %v1103
        %v1248 = vunpack.c.l.b16 %v1104
        %v1249 = vunpack.c.l.b16 %v1105
        %v1250 = vunpack.c.l.b16 %v1106
        %v1251 = vunpack.c.l.b16 %v1107
        %v1252 = vunpack.c.l.b16 %v1108
        %v1253 = vunpack.c.l.b16 %v1109
        %v1254 = vunpack.c.l.b16 %v1110
        %v1255 = vunpack.c.l.b16 %v1111
        %v1256 = vunpack.c.l.b16 %v1112
        %v1257 = vunpack.c.l.b16 %v1113
        %v1258 = vunpack.c.l.b16 %v1114
        %v1259 = vunpack.c.l.b16 %v1115
        %v1260 = vunpack.c.l.b16 %v1116
        %v1261 = vunpack.c.l.b16 %v1117
        %v1262 = vunpack.c.l.b16 %v1118
        %v1263 = vunpack.c.l.b16 %v1119
        %v1264 = vunpack.c.l.b16 %v1120
        %v1265 = vunpack.c.l.b16 %v1121
        %v1266 = vunpack.c.l.b16 %v1122
        %v1267 = vunpack.c.l.b16 %v1123
        %v1268 = vunpack.c.l.b16 %v1124
        %v1269 = vunpack.c.l.b16 %v1125
        %v1270 = vunpack.c.l.b16 %v1126
        %v1271 = vunpack.c.l.b16 %v1127
        %v1272 = vunpack.c.l.b16 %v1128
        %v1273 = vunpack.c.l.b16 %v1129
        %v1274 = vunpack.c.l.b16 %v1130
        %v1275 = vunpack.c.l.b16 %v1131
        %v1276 = vunpack.c.l.b16 %v1132
        %v1277 = vunpack.c.l.b16 %v1133
        %v1278 = vunpack.c.l.b16 %v1134
        %v1279 = vunpack.c.l.b16 %v1135
        %v1280 = vunpack.c.l.b16 %v1136
        %v1281 = vunpack.c.l.b16 %v1137
        %v1282 = vunpack.c.l.b16 %v1138
        %v1283 = vunpack.c.l.b16 %v1139
        %v1284 = vunpack.c.l.b16 %v1140
        %v1285 = vunpack.c.l.b16 %v1141
        %v1286 = vunpack.c.l.b16 %v1142
        %v1287 = vunpack.c.l.b16 %v1143
        %v1288 = vunpack.c.l.b16 %v1144
        %v1289 = vunpack.c.l.b16 %v1145
        %v1290 = vunpack.c.l.b16 %v1146
        %v1291 = vunpack.c.l.b16 %v1147
        %v1292 = vunpack.c.l.b16 %v1148
        %v1293 = vunpack.c.l.b16 %v1149
        %v1294 = vunpack.c.l.b16 %v1150
        %v1295 = vunpack.c.l.b16 %v1151
        %v1296 = vunpack.c.l.b16 %v1152
        %v1297 = vunpack.c.l.b16 %v1153
        %v1298 = vunpack.c.l.b16 %v1154
        %v1299 = vunpack.c.l.b16 %v1155
        %v1300 = vunpack.c.l.b16 %v1156
        %v1301 = vunpack.c.l.b16 %v1157
        %v1302 = vunpack.c.l.b16 %v1158
        %v1303 = vunpack.c.l.b16 %v1159
        %v1304 = vunpack.c.l.b16 %v1160
        %v1305 = vunpack.c.l.b16 %v1161
        %v1306 = vunpack.c.l.b16 %v1162
        %v1307 = vunpack.c.l.b16 %v1163
        %v1308 = vunpack.c.l.b16 %v1164
        %v1309 = vunpack.c.l.b16 %v1165
        %v1310 = vunpack.c.l.b16 %v1166
        %v1311 = vunpack.c.l.b16 %v1167
        %v1312 = vpack.c.b16 %v1241, %v1240
        %v1313 = vpack.c.b16 %v1243, %v1242
        %v1314 = vpack.c.b16 %v1245, %v1244
        %v1315 = vpack.c.b16 %v1247, %v1246
        %v1316 = vpack.c.b16 %v1249, %v1248
        %v1317 = vpack.c.b16 %v1251, %v1250
        %v1318 = vpack.c.b16 %v1253, %v1252
        %v1319 = vpack.c.b16 %v1255, %v1254
        %v1320 = vpack.c.b16 %v1257, %v1256
        %v1321 = vpack.c.b16 %v1259, %v1258
        %v1322 = vpack.c.b16 %v1261, %v1260
        %v1323 = vpack.c.b16 %v1263, %v1262
        %v1324 = vpack.c.b16 %v1265, %v1264
        %v1325 = vpack.c.b16 %v1267, %v1266
        %v1326 = vpack.c.b16 %v1269, %v1268
        %v1327 = vpack.c.b16 %v1271, %v1270
        %v1328 = vpack.c.b16 %v1273, %v1272
        %v1329 = vpack.c.b16 %v1275, %v1274
        %v1330 = vpack.c.b16 %v1277, %v1276
        %v1331 = vpack.c.b16 %v1279, %v1278
        %v1332 = vpack.c.b16 %v1281, %v1280
        %v1333 = vpack.c.b16 %v1283, %v1282
        %v1334 = vpack.c.b16 %v1285, %v1284
        %v1335 = vpack.c.b16 %v1287, %v1286
        %v1336 = vpack.c.b16 %v1289, %v1288
        %v1337 = vpack.c.b16 %v1291, %v1290
        %v1338 = vpack.c.b16 %v1293, %v1292
        %v1339 = vpack.c.b16 %v1295, %v1294
        %v1340 = vpack.c.b16 %v1297, %v1296
        %v1341 = vpack.c.b16 %v1299, %v1298
        %v1342 = vpack.c.b16 %v1301, %v1300
        %v1343 = vpack.c.b16 %v1303, %v1302
        %v1344 = vpack.c.b16 %v1305, %v1304
        %v1345 = vpack.c.b16 %v1307, %v1306
        %v1346 = vpack.c.b16 %v1309, %v1308
        %v1347 = vpack.c.b16 %v1311, %v1310
        %v1385 = vsel %vm257, %v1095, 0
        %1387 = vmatprep.subr.bf16.mxu0 0
        %1388 = vmatpush1.bf16.msra.mxu0 %v1312
        %1389 = vmatprep.subr.bf16.mxu0 0
        %1390 = vmatpush1.bf16.msra.mxu0 %v1313
        %1391 = vmatprep.subr.bf16.mxu0 0
        %1392 = vmatpush1.bf16.msra.mxu0 %v1314
        %1393 = vmatprep.subr.bf16.mxu0 0
        %1394 = vmatpush1.bf16.msra.mxu0 %v1315
        %1395 = vmatprep.subr.bf16.mxu0 0
        %1396 = vmatpush1.bf16.msra.mxu0 %v1316
        %1397 = vmatprep.subr.bf16.mxu0 0
        %1398 = vmatpush1.bf16.msra.mxu0 %v1317
        %1399 = vmatprep.subr.bf16.mxu0 0
        %1400 = vmatpush1.bf16.msra.mxu0 %v1318
        %1401 = vmatprep.subr.bf16.mxu0 0
        %1402 = vmatpush1.bf16.msra.mxu0 %v1319
        %1403 = vmatprep.subr.bf16.mxu0 0
        %1404 = vmatpush1.bf16.msra.mxu0 %v1320
        %1405 = vmatprep.subr.bf16.mxu0 0
        %1406 = vmatpush1.bf16.msra.mxu0 %v1321
        %1407 = vmatprep.subr.bf16.mxu0 0
        %1408 = vmatpush1.bf16.msra.mxu0 %v1322
        %1409 = vmatprep.subr.bf16.mxu0 0
        %1410 = vmatpush1.bf16.msra.mxu0 %v1323
        %1411 = vmatprep.subr.bf16.mxu0 0
        %1412 = vmatpush1.bf16.msra.mxu0 %v1324
        %1413 = vmatprep.subr.bf16.mxu0 0
        %1414 = vmatpush1.bf16.msra.mxu0 %v1325
        %1415 = vmatprep.subr.bf16.mxu0 0
        %1416 = vmatpush1.bf16.msra.mxu0 %v1326
        %1417 = vmatprep.subr.bf16.mxu0 0
        %1418 = vmatpush1.bf16.msra.mxu0 %v1327
        %1419 = vmatprep.mubr.bf16.mxu0 %v1092
        %1420 = vmatmul.mubr.bf16.gmra.mrb[0].mxu0 %v1091
        %v1421 = vpop.f32.mrb[0].mxu0
        %v1422 = vadd.f32 0.0, %v1421
        %v1423 = vpop.f32.mrb[0].mxu0
        %v1424 = vpop.f32.mrb[0].mxu0
        %v1425 = vadd.f32 0.0, %v1424
        %v1426 = vpop.f32.mrb[0].mxu0
        %1427 = vdwg.mxu0
        %1428 = vmatprep.subr.bf16.mxu0 0
        %1429 = vmatpush1.bf16.msra.mxu0 %v1328
        %1430 = vmatprep.subr.bf16.mxu0 0
        %1431 = vmatpush1.bf16.msra.mxu0 %v1329
        %1432 = vmatprep.subr.bf16.mxu0 0
        %1433 = vmatpush1.bf16.msra.mxu0 %v1330
        %1434 = vmatprep.subr.bf16.mxu0 0
        %1435 = vmatpush1.bf16.msra.mxu0 %v1331
        %1436 = vmatprep.subr.bf16.mxu0 0
        %1437 = vmatpush1.bf16.msra.mxu0 %v1332
        %1438 = vmatprep.subr.bf16.mxu0 0
        %1439 = vmatpush1.bf16.msra.mxu0 %v1333
        %1440 = vmatprep.subr.bf16.mxu0 0
        %1441 = vmatpush1.bf16.msra.mxu0 %v1334
        %1442 = vmatprep.subr.bf16.mxu0 0
        %1443 = vmatpush1.bf16.msra.mxu0 %v1335
        %1444 = vmatprep.subr.bf16.mxu0 0
        %1445 = vmatpush1.bf16.msra.mxu0 %v1336
        %1446 = vmatprep.subr.bf16.mxu0 0
        %1447 = vmatpush1.bf16.msra.mxu0 %v1337
        %1448 = vmatprep.subr.bf16.mxu0 0
        %1449 = vmatpush1.bf16.msra.mxu0 %v1338
        %1450 = vmatprep.subr.bf16.mxu0 0
        %1451 = vmatpush1.bf16.msra.mxu0 %v1339
        %1452 = vmatprep.subr.bf16.mxu0 0
        %1453 = vmatpush1.bf16.msra.mxu0 %v1340
        %1454 = vmatprep.subr.bf16.mxu0 0
        %1455 = vmatpush1.bf16.msra.mxu0 %v1341
        %1456 = vmatprep.subr.bf16.mxu0 0
        %1457 = vmatpush1.bf16.msra.mxu0 %v1342
        %1458 = vmatprep.subr.bf16.mxu0 0
        %1459 = vmatpush1.bf16.msra.mxu0 %v1343
        %1460 = vmatprep.mubr.bf16.mxu0 %v1094
        %1461 = vmatmul.mubr.bf16.gmra.mrb[0].mxu0 %v1093
        %v1462 = vpop.f32.mrb[0].mxu0
        %v1463 = vadd.f32 %v1422, %v1462
        %v1464 = vpop.f32.mrb[0].mxu0
        %v1465 = vpop.f32.mrb[0].mxu0
        %v1466 = vadd.f32 %v1425, %v1465
        %v1467 = vpop.f32.mrb[0].mxu0
        %1468 = vdwg.mxu0
        %1469 = vmatprep.subr.bf16.mxu0 0
        %1470 = vmatpush1.bf16.msra.mxu0 %v1344
        %1471 = vmatprep.subr.bf16.mxu0 0
        %1472 = vmatpush1.bf16.msra.mxu0 %v1345
        %1473 = vmatprep.subr.bf16.mxu0 0
        %1474 = vmatpush1.bf16.msra.mxu0 %v1346
        %1475 = vmatprep.subr.bf16.mxu0 0
        %1476 = vmatpush1.bf16.msra.mxu0 %v1347
        %1477 = vmatprep.subr.bf16.mxu0 0
        %1478 = vmatpush1.bf16.msra.mxu0 0
        %1479 = vmatprep.subr.bf16.mxu0 0
        %1480 = vmatpush1.bf16.msra.mxu0 0
        %1481 = vmatprep.subr.bf16.mxu0 0
        %1482 = vmatpush1.bf16.msra.mxu0 0
        %1483 = vmatprep.subr.bf16.mxu0 0
        %1484 = vmatpush1.bf16.msra.mxu0 0
        %1485 = vmatprep.subr.bf16.mxu0 0
        %1486 = vmatpush1.bf16.msra.mxu0 0
        %1487 = vmatprep.subr.bf16.mxu0 0
        %1488 = vmatpush1.bf16.msra.mxu0 0
        %1489 = vmatprep.subr.bf16.mxu0 0
        %1490 = vmatpush1.bf16.msra.mxu0 0
        %1491 = vmatprep.subr.bf16.mxu0 0
        %1492 = vmatpush1.bf16.msra.mxu0 0
        %1493 = vmatprep.subr.bf16.mxu0 0
        %1494 = vmatpush1.bf16.msra.mxu0 0
        %1495 = vmatprep.subr.bf16.mxu0 0
        %1496 = vmatpush1.bf16.msra.mxu0 0
        %1497 = vmatprep.subr.bf16.mxu0 0
        %1498 = vmatpush1.bf16.msra.mxu0 0
        %1499 = vmatprep.subr.bf16.mxu0 0
        %1500 = vmatpush1.bf16.msra.mxu0 0
        %1501 = vmatprep.mubr.bf16.mxu0 0
        %1502 = vmatmul.mubr.bf16.gmra.mrb[0].mxu0 %v1385
        %v1503 = vpop.f32.mrb[0].mxu0
        %v1504 = vadd.f32 %v1463, %v1503
        %v1505 = vpop.f32.mrb[0].mxu0
        %v1506 = vpop.f32.mrb[0].mxu0
        %v1507 = vadd.f32 %v1466, %v1506
        %v1508 = vpop.f32.mrb[0].mxu0
        %1509 = vdwg.mxu0
        %vm1510 = vcmp.gt.f32.partialorder %v1504, 0.0
        %vm1511 = vcmp.gt.f32.partialorder %v1507, 0.0
        %v1512 = vmul.f32 %v1504, 0.01
        %v1513 = vmul.f32 %v1507, 0.01
        %v1514 = vsel %vm1510, %v1504, %v1512
        %v1515 = vsel %vm1511, %v1507, %v1513
        %v1516 = vrot.slane %v1514, 4
        %v1517 = vrot.slane %v1515, 4
        %v1518 = vsel %vm442, %v1516, %v1517
        %v1519 = vsel %vm442, %v1517, %v1516
        %1521 = vrot.lane.b32.xlu0 %v1518, 64
        %v1522 = vpop.permute.xlu0 %1521
        %1525 = vrot.lane.b32.xlu0 %v1519, 64
        %v1526 = vpop.permute.xlu0 %1525
        %v1528 = vsel %vm257, %v1514, %v1522
        %v1529 = vsel %vm257, %v1515, %v1526
        %v1532 = vcombine.low %v1528, %v1529
        %1534 = vst [vmem:[%s190] sm:$0xff] %v1532
        %s1535 = sand.u32 %s115, 1
        %s1536 = scalar_lea.sflag [#allocation3], %s1535
        %s1537 = sand.u32 %s115, 1
        %s1538 = smul.addr %s1537, 8
        %s1539 = scalar_lea.vmem [#allocation2], %s1538
        // Predicated region
        $region37: #{tpu_custom_call.1} parent=35 // pred_check
          %p1540 = pneg %p125
        $region38: #{tpu_custom_call.1} parent=35 // pred_check_branch
          %1542 = sbr.rel (%p1540) target = $region40
        $region39: #{tpu_custom_call.1} parent=35 // pred_region
          %s1544 = ssub.s32 128, 128
          %1545 = vsyncadd %s1536, %s1544
          %s1546 = smul.addr %s18, 2
          %s1547 = smul.addr %s1546, 64
          %s1548 = scalar_lea.hbm %s4, %s1547
          %s1550 = sshll.u32 %s1539, 4
          %s1551 = int_to_ptr.vmem [resolvable:$true] %s1550
          %1553 = dma.vmem_to_hbm [thread:$0]  %s1551, 128, %s1548, %s1536
        $region40: #{tpu_custom_call.1} parent=35 // pred_fallthru
          _
      $region36: #{tpu_custom_call.1} parent=5 // pred_fallthru
        _
      %p1554 = scmp.le.s32.totalorder 2, %s13
      // Predicated region
      $region41: #{tpu_custom_call.1} parent=5 // pred_check
        %p1555 = pneg %p1554
      $region42: #{tpu_custom_call.1} parent=5 // pred_check_branch
        %1557 = sbr.rel (%p1555) target = $region44
      $region43: #{tpu_custom_call.1} parent=5 // pred_region
        %s1558 = ssub.s32 %s13, 2
        // Predicated region
        $region45: #{tpu_custom_call.1} parent=43 // pred_check
          %p1559 = pneg %p131
        $region46: #{tpu_custom_call.1} parent=43 // pred_check_branch
          %1561 = sbr.rel (%p1559) target = $region48
        $region47: #{tpu_custom_call.1} parent=43 // pred_region
          %s1562 = sand.u32 %s116, 1
          %s1563 = scalar_lea.sflag [#allocation3], %s1562
          %s1564 = sand.u32 %s116, 1
          %s1565 = smul.addr %s1564, 8
          %s1566 = scalar_lea.vmem [#allocation2], %s1565
          %1567 = dma.done %s1563, 128
        $region48: #{tpu_custom_call.1} parent=43 // pred_fallthru
          _
      $region44: #{tpu_custom_call.1} parent=5 // pred_fallthru
        _
    $region6: #{tpu_custom_call.1} parent=1 // loop_footer
      %s17 = sadd.s32 1, %s13
    $region7: #{tpu_custom_call.1} parent=1 // loop_footer_branch
      %12 = sbr.rel target = $region3
    $region8: #{tpu_custom_call.1} parent=1 // loop_exit
      _
    %1568 = vsyncpa [#allocation3], 1
    %s1569 = scalar_lea.sflag [#allocation3], 1
    %1570 = vsyncpa %s1569, 1

</llo_original>
